<compile_context>
chip_gen: v5e
topology: v5e:2x2
jax: 0.10.0
libtpu: 0.0.40
codegen_flags: <defaults>
</compile_context>

<pallas_src>
import math
import jax
import jax.numpy as jnp
from jax import lax
from jax.experimental import pallas as pl
from jax.experimental.pallas import tpu as pltpu


def _round_up(x, m):
    return ((x + m - 1) // m) * m


def _pad_gates(w, h, hp, axis=0):
    """`w` has 4*h along `axis` (gate order [i,f,g,o]); zero-pad each gate chunk to hp."""
    if hp == h:
        return w
    chunks = jnp.split(w, 4, axis=axis)
    pad = [(0, 0)] * w.ndim
    pad[axis] = (0, hp - h)
    return jnp.concatenate([jnp.pad(c, pad) for c in chunks], axis=axis)


def _sigmoid(x):
    # tanh-form sigmoid: a single EUP transcendental per call and exact (no approx recip
    # on the recurrent path).
    return 0.5 * (1.0 + jnp.tanh(0.5 * x))


# ----------------------------------------------------------------------------
# Pallas kernel: one grid step == `time_block` LSTM timesteps for one batch block.
# h/c carried in VMEM scratch across the sequential ("arbitrary") time grid axis.
# ----------------------------------------------------------------------------
def _lstm_kernel(gx_ref, whh_ref,          # inputs
                 hs_ref, cs_ref,           # outputs
                 h_scr, c_scr):            # scratch (carry)
    """
    gx_ref : (Tb, Bb, 4*Hp) bf16  precomputed x @ W_ih^T + (b_ih + b_hh)  (time-major)
    whh_ref: (Hp, 4*Hp)     bf16  resident recurrent weights (constant block index)
    hs_ref : (Tb, Bb, Hp)   f32   (time-major; transposed back in the wrapper)
    cs_ref : (Tb, Bb, Hp)   f32
    h_scr  : (Bb, Hp)       f32
    c_scr  : (Bb, Hp)       f32
    """
    @pl.when(pl.program_id(1) == 0)
    def _():
        # hx is None in the reference forward -> zero initial state.
        h_scr[...] = jnp.zeros_like(h_scr)
        c_scr[...] = jnp.zeros_like(c_scr)

    whh = whh_ref[...]                       # (Hp, 4Hp) bf16, read once per grid step
    hp = h_scr.shape[-1]
    tb = gx_ref.shape[0]

    def step(j, carry):
        h, c = carry
        # Dense full-vreg load of one timestep (time-major layout), widened to f32 and
        # added to the f32 MXU accumulation of the recurrent matmul.
        gates = gx_ref[j].astype(jnp.float32) + jnp.dot(
            h.astype(jnp.bfloat16), whh, preferred_element_type=jnp.float32)  # (Bb, 4Hp)
        i_g = gates[:, 0 * hp:1 * hp]
        f_g = gates[:, 1 * hp:2 * hp]
        g_g = gates[:, 2 * hp:3 * hp]
        o_g = gates[:, 3 * hp:4 * hp]
        # TODO(synk): on v6e/v7x the gate nonlinearities could run in bf16 (native VPU/EUP
        # bf16); kept f32 here for numerical fidelity to the reference.
        c = _sigmoid(i_g) * jnp.tanh(g_g) + _sigmoid(f_g) * c
        h = _sigmoid(o_g) * jnp.tanh(c)
        hs_ref[j] = h.astype(hs_ref.dtype)    # dense, unmasked store
        cs_ref[j] = c.astype(cs_ref.dtype)
        return (h, c)

    h, c = lax.fori_loop(0, tb, step, (h_scr[...], c_scr[...]), unroll=True)
    h_scr[...] = h
    c_scr[...] = c


def _vmem_working_set(bb, tb, hp):
    gx = 2 * bb * tb * 4 * hp * 2          # bf16 gx block, double-buffered
    outs = 2 * 2 * bb * tb * hp * 4        # hs + cs f32 blocks, double-buffered each
    whh = hp * 4 * hp * 2                  # bf16 weights, single-buffered (Buffered(1))
    scr = 2 * bb * hp * 4                  # h/c carry scratch
    return gx + outs + whh + scr


def stateful_lstm_pallas(inputs, weight_ih, weight_hh, bias_ih, bias_hh,
                         *, time_block=None, batch_block=None):
    """inputs: (B, T, Di).  Returns ((hs, cs), (h_last, c_last)) like the torch module."""
    B, T, Di = inputs.shape
    H = weight_hh.shape[1]

    Hp = _round_up(H, 128)                 # lane-aligned hidden size (per gate)

    # --- tile selection -------------------------------------------------------------
    if batch_block is None:
        batch_block = min(_round_up(B, 16), 128)   # bf16 LHS packs 16 sublanes; fill MXU M
        # If one block would cover the whole batch, split in two so the "parallel" axis
        # maps onto both v7x TensorCores instead of leaving one idle.
        if _round_up(B, batch_block) == batch_block and batch_block % 32 == 0:
            batch_block //= 2
    if time_block is None:
        time_block = min(16, _round_up(T, 8))      # amortize per-grid-step overhead

    # Shrink tiles until the estimated working set fits the most constrained generation
    # (v7x: 64 MiB VMEM per TensorCore); leave headroom for Mosaic internal scratch.
    _V7X_SAFE_BUDGET = 44 * 1024 * 1024
    while _vmem_working_set(batch_block, time_block, Hp) > _V7X_SAFE_BUDGET and time_block > 8:
        time_block = max(8, time_block // 2)
    while _vmem_working_set(batch_block, time_block, Hp) > _V7X_SAFE_BUDGET and batch_block > 16:
        batch_block = max(16, batch_block // 2)

    Bp = _round_up(B, batch_block)
    Tp = _round_up(T, time_block)
    ws = _vmem_working_set(batch_block, time_block, Hp)
    vmem_limit = int(min(max(ws * 5 // 4 + (2 << 20), 32 << 20), 48 << 20))

    f32, bf16 = jnp.float32, jnp.bfloat16

    # --- parameters, padded per gate to Hp ------------------------------------------
    wih_p = _pad_gates(weight_ih.astype(f32), H, Hp, axis=0)               # (4Hp, Di)
    whh_p = _pad_gates(weight_hh.astype(f32), H, Hp, axis=0)               # (4Hp, H)
    whh_p = jnp.pad(whh_p, ((0, 0), (0, Hp - H)))                          # (4Hp, Hp)
    bias_p = _pad_gates((bias_ih + bias_hh).astype(f32), H, Hp, axis=0)    # (4Hp,)

    # --- hoisted input projection: one big bf16 matmul over all (B*T) rows, f32 acc.
    # Produced TIME-MAJOR (Tp, Bp, 4Hp) and materialized in bf16 (dominant HBM stream).
    # Padded gate lanes get zero gates -> padded h/c lanes stay exactly 0.
    # TODO(synk): optionally fuse this projection into the kernel (resident W_ih) to
    # eliminate the gx HBM write+read entirely on v5e/v6e.
    x_p = jnp.pad(inputs.astype(f32), ((0, Bp - B), (0, Tp - T), (0, 0)))  # (Bp, Tp, Di)
    gx = jnp.einsum('btd,gd->tbg', x_p.astype(bf16), wih_p.astype(bf16),
                    preferred_element_type=f32) + bias_p                   # (Tp, Bp, 4Hp)
    gx = gx.astype(bf16)

    whh_t = jnp.transpose(whh_p).astype(bf16)                              # (Hp, 4Hp)

    n_b = Bp // batch_block
    n_t = Tp // time_block

    hs_p, cs_p = pl.pallas_call(
        _lstm_kernel,
        out_shape=(jax.ShapeDtypeStruct((Tp, Bp, Hp), f32),
                   jax.ShapeDtypeStruct((Tp, Bp, Hp), f32)),
        grid_spec=pltpu.PrefetchScalarGridSpec(
            num_scalar_prefetch=0,
            grid=(n_b, n_t),
            in_specs=[
                pl.BlockSpec((time_block, batch_block, 4 * Hp), lambda b, t: (t, b, 0)),
                # Resident recurrent weights: constant index -> single buffer is enough.
                pl.BlockSpec((Hp, 4 * Hp), lambda b, t: (0, 0),
                             pipeline_mode=pl.Buffered(1)),
            ],
            out_specs=[
                pl.BlockSpec((time_block, batch_block, Hp), lambda b, t: (t, b, 0)),
                pl.BlockSpec((time_block, batch_block, Hp), lambda b, t: (t, b, 0)),
            ],
            scratch_shapes=[
                pltpu.VMEM((batch_block, Hp), f32),   # h carry
                pltpu.VMEM((batch_block, Hp), f32),   # c carry
            ],
        ),
        compiler_params=pltpu.CompilerParams(
            dimension_semantics=("parallel", "arbitrary"),   # batch across cores; time serial
            vmem_limit_bytes=vmem_limit,
        ),
    )(gx, whh_t)

    # Back to batch-major (B, T, H), dropping padding.
    hs = jnp.transpose(hs_p[:T, :B, :H], (1, 0, 2))
    cs = jnp.transpose(cs_p[:T, :B, :H], (1, 0, 2))
    hx = (hs[:, -1], cs[:, -1])   # length=None path -> last-step state
    return (hs, cs), hx


# ----------------------------------------------------------------------------
# Deterministic parameter init mirroring StatefulLSTM.reset_parameters():
#   weight_hh: orthogonal, weight_ih: kaiming_normal, biases zero except
#   bias_ih's 'f' chunk (second quarter) set to 1.
# ----------------------------------------------------------------------------
def init_params(key, input_size, hidden_size):
    k_hh, k_ih = jax.random.split(key)
    H4 = 4 * hidden_size
    a = jax.random.normal(k_hh, (H4, hidden_size), dtype=jnp.float32)
    q, r = jnp.linalg.qr(a)
    q = q * jnp.sign(jnp.diagonal(r))[None, :]
    weight_hh = q                                             # (4H, H)
    std = math.sqrt(2.0 / input_size)
    weight_ih = std * jax.random.normal(k_ih, (H4, input_size), dtype=jnp.float32)
    bias_hh = jnp.zeros((H4,), dtype=jnp.float32)
    bias_ih = jnp.zeros((H4,), dtype=jnp.float32)
    bias_ih = bias_ih.at[hidden_size:2 * hidden_size].set(1.0)    # forget-gate bias = 1
    return weight_ih, weight_hh, bias_ih, bias_hh


# Pure-JAX f32 reference (lax.scan) for a correctness check.
def stateful_lstm_ref(inputs, weight_ih, weight_hh, bias_ih, bias_hh):
    B, T, Di = inputs.shape
    H = weight_hh.shape[1]
    x_t = jnp.transpose(inputs, (1, 0, 2)).astype(jnp.float32)
    wih_t = weight_ih.T
    whh_t = weight_hh.T
    b = bias_ih + bias_hh

    def step(carry, x):
        h, c = carry
        gates = x @ wih_t + h @ whh_t + b
        i, f, g, o = jnp.split(gates, 4, axis=1)
        c = jax.nn.sigmoid(i) * jnp.tanh(g) + jax.nn.sigmoid(f) * c
        h = jax.nn.sigmoid(o) * jnp.tanh(c)
        return (h, c), (h, c)

    init = (jnp.zeros((B, H), jnp.float32), jnp.zeros((B, H), jnp.float32))
    (h_last, c_last), (hs, cs) = lax.scan(step, init, x_t)
    return (jnp.transpose(hs, (1, 0, 2)), jnp.transpose(cs, (1, 0, 2))), (h_last, c_last)


if __name__ == "__main__":
    B, T, Di, H = 2, 8, 16, 32

    key = jax.random.PRNGKey(0)
    k_param, k_x = jax.random.split(key)
    weight_ih, weight_hh, bias_ih, bias_hh = init_params(k_param, Di, H)
    x = jax.random.normal(k_x, (B, T, Di), dtype=jnp.float32)

    (hs, cs), (h_last, c_last) = stateful_lstm_pallas(x, weight_ih, weight_hh, bias_ih, bias_hh)
    jax.block_until_ready((hs, cs, h_last, c_last))

    (hs_ref, cs_ref), (h_ref, c_ref) = stateful_lstm_ref(x, weight_ih, weight_hh, bias_ih, bias_hh)
    assert hs.shape == (B, T, H) and cs.shape == (B, T, H)
    # Tolerance relaxed vs f32 reference: matmuls feed the MXU in bf16 (f32 accumulate)
    # and gx is materialized in bf16.
    tol = dict(atol=5e-2, rtol=5e-2)
    assert jnp.allclose(hs, hs_ref, **tol)
    assert jnp.allclose(cs, cs_ref, **tol)
    assert jnp.allclose(h_last, h_ref, **tol)
    assert jnp.allclose(c_last, c_ref, **tol)

    print("KERNEL_OK")
</pallas_src>

<mosaic_0001>
module attributes {stable_mosaic.version = 11 : i64} {
  func.func @_lstm_kernel(%arg0: i32, %arg1: i32, %arg2: memref<8x16x512xbf16, #tpu.memory_space<vmem>>, %arg3: memref<128x512xbf16, #tpu.memory_space<vmem>>, %arg4: memref<8x16x128xf32, #tpu.memory_space<vmem>>, %arg5: memref<8x16x128xf32, #tpu.memory_space<vmem>>, %arg6: memref<16x128xf32, #tpu.memory_space<vmem>>, %arg7: memref<16x128xf32, #tpu.memory_space<vmem>>) attributes {dimension_semantics = [#tpu.dimension_semantics<parallel>, #tpu.dimension_semantics<arbitrary>], iteration_bounds = array<i64: 1, 1>, scalar_prefetch = 0 : i64, scratch_operands = 2 : i64, tpu.core_type = #tpu.core_type<tc>, window_params = [{transform_indices = @transform_0, window_bounds = array<i64: 8, 16, 512>}, {pipeline_mode = #tpu.pipeline_mode<synchronous>, transform_indices = @transform_1, window_bounds = array<i64: 128, 512>}, {transform_indices = @transform_2, window_bounds = array<i64: 8, 16, 128>}, {transform_indices = @transform_3, window_bounds = array<i64: 8, 16, 128>}]} {
    %c0_i32 = arith.constant 0 : i32
    %0 = arith.cmpi eq, %arg1, %c0_i32 : i32
    %1 = arith.extui %0 : i1 to i32
    %c0_i32_0 = arith.constant 0 : i32
    %2 = arith.cmpi ne, %1, %c0_i32_0 : i32
    scf.if %2 {
      %cst_138 = arith.constant 0.000000e+00 : f32
      %376 = vector.broadcast %cst_138 : f32 to vector<16x128xf32>
      %c0_139 = arith.constant 0 : index
      %c0_140 = arith.constant 0 : index
      %377 = vector.load %arg6[%c0_139, %c0_140] : memref<16x128xf32, #tpu.memory_space<vmem>>, vector<16x128xf32>
      tpu.vector_store %arg6[%c0_139, %c0_140], %376 {strides = array<i32>} : memref<16x128xf32, #tpu.memory_space<vmem>>, vector<16x128xf32>,
      %cst_141 = arith.constant 0.000000e+00 : f32
      %378 = vector.broadcast %cst_141 : f32 to vector<16x128xf32>
      %c0_142 = arith.constant 0 : index
      %c0_143 = arith.constant 0 : index
      %379 = vector.load %arg7[%c0_142, %c0_143] : memref<16x128xf32, #tpu.memory_space<vmem>>, vector<16x128xf32>
      tpu.vector_store %arg7[%c0_142, %c0_143], %378 {strides = array<i32>} : memref<16x128xf32, #tpu.memory_space<vmem>>, vector<16x128xf32>,
    } else {
    }
    %c0 = arith.constant 0 : index
    %c0_1 = arith.constant 0 : index
    %3 = vector.load %arg3[%c0, %c0_1] : memref<128x512xbf16, #tpu.memory_space<vmem>>, vector<128x512xbf16>
    %c0_2 = arith.constant 0 : index
    %c0_3 = arith.constant 0 : index
    %4 = vector.load %arg6[%c0_2, %c0_3] : memref<16x128xf32, #tpu.memory_space<vmem>>, vector<16x128xf32>
    %c0_4 = arith.constant 0 : index
    %c0_5 = arith.constant 0 : index
    %5 = vector.load %arg7[%c0_4, %c0_5] : memref<16x128xf32, #tpu.memory_space<vmem>>, vector<16x128xf32>
    %c0_i32_6 = arith.constant 0 : i32
    %6 = arith.index_cast %c0_i32_6 : i32 to index
    %c0_7 = arith.constant 0 : index
    %c0_8 = arith.constant 0 : index
    %7 = vector.load %arg2[%6, %c0_7, %c0_8] : memref<8x16x512xbf16, #tpu.memory_space<vmem>>, vector<1x16x512xbf16>
    %8 = vector.shape_cast %7 : vector<1x16x512xbf16> to vector<16x512xbf16>
    %9 = arith.extf %8 : vector<16x512xbf16> to vector<16x512xf32>
    %10 = arith.truncf %4 : vector<16x128xf32> to vector<16x128xbf16>
    %cst = arith.constant dense<0.000000e+00> : vector<16x512xf32>
    %11 = tpu.matmul %10, %3, %cst {dimension_numbers = #tpu.dot_dimension_numbers<[1], [0], [0], [1], [0, 0, 1, 1], [], []>} : vector<16x128xbf16>, vector<128x512xbf16>, vector<16x512xf32> -> vector<16x512xf32>
    %12 = arith.addf %9, %11 : vector<16x512xf32>
    %13 = vector.extract_strided_slice %12 {offsets = [0, 0], sizes = [16, 128], strides = [1, 1]} : vector<16x512xf32> to vector<16x128xf32>
    %14 = vector.extract_strided_slice %12 {offsets = [0, 128], sizes = [16, 128], strides = [1, 1]} : vector<16x512xf32> to vector<16x128xf32>
    %15 = vector.extract_strided_slice %12 {offsets = [0, 256], sizes = [16, 128], strides = [1, 1]} : vector<16x512xf32> to vector<16x128xf32>
    %16 = vector.extract_strided_slice %12 {offsets = [0, 384], sizes = [16, 128], strides = [1, 1]} : vector<16x512xf32> to vector<16x128xf32>
    %cst_9 = arith.constant 5.000000e-01 : f32
    %17 = vector.broadcast %cst_9 : f32 to vector<16x128xf32>
    %18 = arith.mulf %17, %13 : vector<16x128xf32>
    %19 = math.tanh %18 : vector<16x128xf32>
    %cst_10 = arith.constant 1.000000e+00 : f32
    %20 = vector.broadcast %cst_10 : f32 to vector<16x128xf32>
    %21 = arith.addf %20, %19 : vector<16x128xf32>
    %cst_11 = arith.constant 5.000000e-01 : f32
    %22 = vector.broadcast %cst_11 : f32 to vector<16x128xf32>
    %23 = arith.mulf %22, %21 : vector<16x128xf32>
    %24 = math.tanh %15 : vector<16x128xf32>
    %25 = arith.mulf %23, %24 : vector<16x128xf32>
    %cst_12 = arith.constant 5.000000e-01 : f32
    %26 = vector.broadcast %cst_12 : f32 to vector<16x128xf32>
    %27 = arith.mulf %26, %14 : vector<16x128xf32>
    %28 = math.tanh %27 : vector<16x128xf32>
    %cst_13 = arith.constant 1.000000e+00 : f32
    %29 = vector.broadcast %cst_13 : f32 to vector<16x128xf32>
    %30 = arith.addf %29, %28 : vector<16x128xf32>
    %cst_14 = arith.constant 5.000000e-01 : f32
    %31 = vector.broadcast %cst_14 : f32 to vector<16x128xf32>
    %32 = arith.mulf %31, %30 : vector<16x128xf32>
    %33 = arith.mulf %32, %5 : vector<16x128xf32>
    %34 = arith.addf %25, %33 : vector<16x128xf32>
    %cst_15 = arith.constant 5.000000e-01 : f32
    %35 = vector.broadcast %cst_15 : f32 to vector<16x128xf32>
    %36 = arith.mulf %35, %16 : vector<16x128xf32>
    %37 = math.tanh %36 : vector<16x128xf32>
    %cst_16 = arith.constant 1.000000e+00 : f32
    %38 = vector.broadcast %cst_16 : f32 to vector<16x128xf32>
    %39 = arith.addf %38, %37 : vector<16x128xf32>
    %cst_17 = arith.constant 5.000000e-01 : f32
    %40 = vector.broadcast %cst_17 : f32 to vector<16x128xf32>
    %41 = arith.mulf %40, %39 : vector<16x128xf32>
    %42 = math.tanh %34 : vector<16x128xf32>
    %43 = arith.mulf %41, %42 : vector<16x128xf32>
    %44 = arith.index_cast %c0_i32_6 : i32 to index
    %c0_18 = arith.constant 0 : index
    %c0_19 = arith.constant 0 : index
    %45 = vector.load %arg4[%44, %c0_18, %c0_19] : memref<8x16x128xf32, #tpu.memory_space<vmem>>, vector<1x16x128xf32>
    %46 = vector.shape_cast %45 : vector<1x16x128xf32> to vector<16x128xf32>
    %47 = vector.shape_cast %43 : vector<16x128xf32> to vector<1x16x128xf32>
    tpu.vector_store %arg4[%44, %c0_18, %c0_19], %47 {strides = array<i32>} : memref<8x16x128xf32, #tpu.memory_space<vmem>>, vector<1x16x128xf32>,
    %48 = arith.index_cast %c0_i32_6 : i32 to index
    %c0_20 = arith.constant 0 : index
    %c0_21 = arith.constant 0 : index
    %49 = vector.load %arg5[%48, %c0_20, %c0_21] : memref<8x16x128xf32, #tpu.memory_space<vmem>>, vector<1x16x128xf32>
    %50 = vector.shape_cast %49 : vector<1x16x128xf32> to vector<16x128xf32>
    %51 = vector.shape_cast %34 : vector<16x128xf32> to vector<1x16x128xf32>
    tpu.vector_store %arg5[%48, %c0_20, %c0_21], %51 {strides = array<i32>} : memref<8x16x128xf32, #tpu.memory_space<vmem>>, vector<1x16x128xf32>,
    %c1_i32 = arith.constant 1 : i32
    %52 = arith.index_cast %c1_i32 : i32 to index
    %c0_22 = arith.constant 0 : index
    %c0_23 = arith.constant 0 : index
    %53 = vector.load %arg2[%52, %c0_22, %c0_23] : memref<8x16x512xbf16, #tpu.memory_space<vmem>>, vector<1x16x512xbf16>
    %54 = vector.shape_cast %53 : vector<1x16x512xbf16> to vector<16x512xbf16>
    %55 = arith.extf %54 : vector<16x512xbf16> to vector<16x512xf32>
    %56 = arith.truncf %43 : vector<16x128xf32> to vector<16x128xbf16>
    %cst_24 = arith.constant dense<0.000000e+00> : vector<16x512xf32>
    %57 = tpu.matmul %56, %3, %cst_24 {dimension_numbers = #tpu.dot_dimension_numbers<[1], [0], [0], [1], [0, 0, 1, 1], [], []>} : vector<16x128xbf16>, vector<128x512xbf16>, vector<16x512xf32> -> vector<16x512xf32>
    %58 = arith.addf %55, %57 : vector<16x512xf32>
    %59 = vector.extract_strided_slice %58 {offsets = [0, 0], sizes = [16, 128], strides = [1, 1]} : vector<16x512xf32> to vector<16x128xf32>
    %60 = vector.extract_strided_slice %58 {offsets = [0, 128], sizes = [16, 128], strides = [1, 1]} : vector<16x512xf32> to vector<16x128xf32>
    %61 = vector.extract_strided_slice %58 {offsets = [0, 256], sizes = [16, 128], strides = [1, 1]} : vector<16x512xf32> to vector<16x128xf32>
    %62 = vector.extract_strided_slice %58 {offsets = [0, 384], sizes = [16, 128], strides = [1, 1]} : vector<16x512xf32> to vector<16x128xf32>
    %cst_25 = arith.constant 5.000000e-01 : f32
    %63 = vector.broadcast %cst_25 : f32 to vector<16x128xf32>
    %64 = arith.mulf %63, %59 : vector<16x128xf32>
    %65 = math.tanh %64 : vector<16x128xf32>
    %cst_26 = arith.constant 1.000000e+00 : f32
    %66 = vector.broadcast %cst_26 : f32 to vector<16x128xf32>
    %67 = arith.addf %66, %65 : vector<16x128xf32>
    %cst_27 = arith.constant 5.000000e-01 : f32
    %68 = vector.broadcast %cst_27 : f32 to vector<16x128xf32>
    %69 = arith.mulf %68, %67 : vector<16x128xf32>
    %70 = math.tanh %61 : vector<16x128xf32>
    %71 = arith.mulf %69, %70 : vector<16x128xf32>
    %cst_28 = arith.constant 5.000000e-01 : f32
    %72 = vector.broadcast %cst_28 : f32 to vector<16x128xf32>
    %73 = arith.mulf %72, %60 : vector<16x128xf32>
    %74 = math.tanh %73 : vector<16x128xf32>
    %cst_29 = arith.constant 1.000000e+00 : f32
    %75 = vector.broadcast %cst_29 : f32 to vector<16x128xf32>
    %76 = arith.addf %75, %74 : vector<16x128xf32>
    %cst_30 = arith.constant 5.000000e-01 : f32
    %77 = vector.broadcast %cst_30 : f32 to vector<16x128xf32>
    %78 = arith.mulf %77, %76 : vector<16x128xf32>
    %79 = arith.mulf %78, %34 : vector<16x128xf32>
    %80 = arith.addf %71, %79 : vector<16x128xf32>
    %cst_31 = arith.constant 5.000000e-01 : f32
    %81 = vector.broadcast %cst_31 : f32 to vector<16x128xf32>
    %82 = arith.mulf %81, %62 : vector<16x128xf32>
    %83 = math.tanh %82 : vector<16x128xf32>
    %cst_32 = arith.constant 1.000000e+00 : f32
    %84 = vector.broadcast %cst_32 : f32 to vector<16x128xf32>
    %85 = arith.addf %84, %83 : vector<16x128xf32>
    %cst_33 = arith.constant 5.000000e-01 : f32
    %86 = vector.broadcast %cst_33 : f32 to vector<16x128xf32>
    %87 = arith.mulf %86, %85 : vector<16x128xf32>
    %88 = math.tanh %80 : vector<16x128xf32>
    %89 = arith.mulf %87, %88 : vector<16x128xf32>
    %90 = arith.index_cast %c1_i32 : i32 to index
    %c0_34 = arith.constant 0 : index
    %c0_35 = arith.constant 0 : index
    %91 = vector.load %arg4[%90, %c0_34, %c0_35] : memref<8x16x128xf32, #tpu.memory_space<vmem>>, vector<1x16x128xf32>
    %92 = vector.shape_cast %91 : vector<1x16x128xf32> to vector<16x128xf32>
    %93 = vector.shape_cast %89 : vector<16x128xf32> to vector<1x16x128xf32>
    tpu.vector_store %arg4[%90, %c0_34, %c0_35], %93 {strides = array<i32>} : memref<8x16x128xf32, #tpu.memory_space<vmem>>, vector<1x16x128xf32>,
    %94 = arith.index_cast %c1_i32 : i32 to index
    %c0_36 = arith.constant 0 : index
    %c0_37 = arith.constant 0 : index
    %95 = vector.load %arg5[%94, %c0_36, %c0_37] : memref<8x16x128xf32, #tpu.memory_space<vmem>>, vector<1x16x128xf32>
    %96 = vector.shape_cast %95 : vector<1x16x128xf32> to vector<16x128xf32>
    %97 = vector.shape_cast %80 : vector<16x128xf32> to vector<1x16x128xf32>
    tpu.vector_store %arg5[%94, %c0_36, %c0_37], %97 {strides = array<i32>} : memref<8x16x128xf32, #tpu.memory_space<vmem>>, vector<1x16x128xf32>,
    %c2_i32 = arith.constant 2 : i32
    %98 = arith.index_cast %c2_i32 : i32 to index
    %c0_38 = arith.constant 0 : index
    %c0_39 = arith.constant 0 : index
    %99 = vector.load %arg2[%98, %c0_38, %c0_39] : memref<8x16x512xbf16, #tpu.memory_space<vmem>>, vector<1x16x512xbf16>
    %100 = vector.shape_cast %99 : vector<1x16x512xbf16> to vector<16x512xbf16>
    %101 = arith.extf %100 : vector<16x512xbf16> to vector<16x512xf32>
    %102 = arith.truncf %89 : vector<16x128xf32> to vector<16x128xbf16>
    %cst_40 = arith.constant dense<0.000000e+00> : vector<16x512xf32>
    %103 = tpu.matmul %102, %3, %cst_40 {dimension_numbers = #tpu.dot_dimension_numbers<[1], [0], [0], [1], [0, 0, 1, 1], [], []>} : vector<16x128xbf16>, vector<128x512xbf16>, vector<16x512xf32> -> vector<16x512xf32>
    %104 = arith.addf %101, %103 : vector<16x512xf32>
    %105 = vector.extract_strided_slice %104 {offsets = [0, 0], sizes = [16, 128], strides = [1, 1]} : vector<16x512xf32> to vector<16x128xf32>
    %106 = vector.extract_strided_slice %104 {offsets = [0, 128], sizes = [16, 128], strides = [1, 1]} : vector<16x512xf32> to vector<16x128xf32>
    %107 = vector.extract_strided_slice %104 {offsets = [0, 256], sizes = [16, 128], strides = [1, 1]} : vector<16x512xf32> to vector<16x128xf32>
    %108 = vector.extract_strided_slice %104 {offsets = [0, 384], sizes = [16, 128], strides = [1, 1]} : vector<16x512xf32> to vector<16x128xf32>
    %cst_41 = arith.constant 5.000000e-01 : f32
    %109 = vector.broadcast %cst_41 : f32 to vector<16x128xf32>
    %110 = arith.mulf %109, %105 : vector<16x128xf32>
    %111 = math.tanh %110 : vector<16x128xf32>
    %cst_42 = arith.constant 1.000000e+00 : f32
    %112 = vector.broadcast %cst_42 : f32 to vector<16x128xf32>
    %113 = arith.addf %112, %111 : vector<16x128xf32>
    %cst_43 = arith.constant 5.000000e-01 : f32
    %114 = vector.broadcast %cst_43 : f32 to vector<16x128xf32>
    %115 = arith.mulf %114, %113 : vector<16x128xf32>
    %116 = math.tanh %107 : vector<16x128xf32>
    %117 = arith.mulf %115, %116 : vector<16x128xf32>
    %cst_44 = arith.constant 5.000000e-01 : f32
    %118 = vector.broadcast %cst_44 : f32 to vector<16x128xf32>
    %119 = arith.mulf %118, %106 : vector<16x128xf32>
    %120 = math.tanh %119 : vector<16x128xf32>
    %cst_45 = arith.constant 1.000000e+00 : f32
    %121 = vector.broadcast %cst_45 : f32 to vector<16x128xf32>
    %122 = arith.addf %121, %120 : vector<16x128xf32>
    %cst_46 = arith.constant 5.000000e-01 : f32
    %123 = vector.broadcast %cst_46 : f32 to vector<16x128xf32>
    %124 = arith.mulf %123, %122 : vector<16x128xf32>
    %125 = arith.mulf %124, %80 : vector<16x128xf32>
    %126 = arith.addf %117, %125 : vector<16x128xf32>
    %cst_47 = arith.constant 5.000000e-01 : f32
    %127 = vector.broadcast %cst_47 : f32 to vector<16x128xf32>
    %128 = arith.mulf %127, %108 : vector<16x128xf32>
    %129 = math.tanh %128 : vector<16x128xf32>
    %cst_48 = arith.constant 1.000000e+00 : f32
    %130 = vector.broadcast %cst_48 : f32 to vector<16x128xf32>
    %131 = arith.addf %130, %129 : vector<16x128xf32>
    %cst_49 = arith.constant 5.000000e-01 : f32
    %132 = vector.broadcast %cst_49 : f32 to vector<16x128xf32>
    %133 = arith.mulf %132, %131 : vector<16x128xf32>
    %134 = math.tanh %126 : vector<16x128xf32>
    %135 = arith.mulf %133, %134 : vector<16x128xf32>
    %136 = arith.index_cast %c2_i32 : i32 to index
    %c0_50 = arith.constant 0 : index
    %c0_51 = arith.constant 0 : index
    %137 = vector.load %arg4[%136, %c0_50, %c0_51] : memref<8x16x128xf32, #tpu.memory_space<vmem>>, vector<1x16x128xf32>
    %138 = vector.shape_cast %137 : vector<1x16x128xf32> to vector<16x128xf32>
    %139 = vector.shape_cast %135 : vector<16x128xf32> to vector<1x16x128xf32>
    tpu.vector_store %arg4[%136, %c0_50, %c0_51], %139 {strides = array<i32>} : memref<8x16x128xf32, #tpu.memory_space<vmem>>, vector<1x16x128xf32>,
    %140 = arith.index_cast %c2_i32 : i32 to index
    %c0_52 = arith.constant 0 : index
    %c0_53 = arith.constant 0 : index
    %141 = vector.load %arg5[%140, %c0_52, %c0_53] : memref<8x16x128xf32, #tpu.memory_space<vmem>>, vector<1x16x128xf32>
    %142 = vector.shape_cast %141 : vector<1x16x128xf32> to vector<16x128xf32>
    %143 = vector.shape_cast %126 : vector<16x128xf32> to vector<1x16x128xf32>
    tpu.vector_store %arg5[%140, %c0_52, %c0_53], %143 {strides = array<i32>} : memref<8x16x128xf32, #tpu.memory_space<vmem>>, vector<1x16x128xf32>,
    %c3_i32 = arith.constant 3 : i32
    %144 = arith.index_cast %c3_i32 : i32 to index
    %c0_54 = arith.constant 0 : index
    %c0_55 = arith.constant 0 : index
    %145 = vector.load %arg2[%144, %c0_54, %c0_55] : memref<8x16x512xbf16, #tpu.memory_space<vmem>>, vector<1x16x512xbf16>
    %146 = vector.shape_cast %145 : vector<1x16x512xbf16> to vector<16x512xbf16>
    %147 = arith.extf %146 : vector<16x512xbf16> to vector<16x512xf32>
    %148 = arith.truncf %135 : vector<16x128xf32> to vector<16x128xbf16>
    %cst_56 = arith.constant dense<0.000000e+00> : vector<16x512xf32>
    %149 = tpu.matmul %148, %3, %cst_56 {dimension_numbers = #tpu.dot_dimension_numbers<[1], [0], [0], [1], [0, 0, 1, 1], [], []>} : vector<16x128xbf16>, vector<128x512xbf16>, vector<16x512xf32> -> vector<16x512xf32>
    %150 = arith.addf %147, %149 : vector<16x512xf32>
    %151 = vector.extract_strided_slice %150 {offsets = [0, 0], sizes = [16, 128], strides = [1, 1]} : vector<16x512xf32> to vector<16x128xf32>
    %152 = vector.extract_strided_slice %150 {offsets = [0, 128], sizes = [16, 128], strides = [1, 1]} : vector<16x512xf32> to vector<16x128xf32>
    %153 = vector.extract_strided_slice %150 {offsets = [0, 256], sizes = [16, 128], strides = [1, 1]} : vector<16x512xf32> to vector<16x128xf32>
    %154 = vector.extract_strided_slice %150 {offsets = [0, 384], sizes = [16, 128], strides = [1, 1]} : vector<16x512xf32> to vector<16x128xf32>
    %cst_57 = arith.constant 5.000000e-01 : f32
    %155 = vector.broadcast %cst_57 : f32 to vector<16x128xf32>
    %156 = arith.mulf %155, %151 : vector<16x128xf32>
    %157 = math.tanh %156 : vector<16x128xf32>
    %cst_58 = arith.constant 1.000000e+00 : f32
    %158 = vector.broadcast %cst_58 : f32 to vector<16x128xf32>
    %159 = arith.addf %158, %157 : vector<16x128xf32>
    %cst_59 = arith.constant 5.000000e-01 : f32
    %160 = vector.broadcast %cst_59 : f32 to vector<16x128xf32>
    %161 = arith.mulf %160, %159 : vector<16x128xf32>
    %162 = math.tanh %153 : vector<16x128xf32>
    %163 = arith.mulf %161, %162 : vector<16x128xf32>
    %cst_60 = arith.constant 5.000000e-01 : f32
    %164 = vector.broadcast %cst_60 : f32 to vector<16x128xf32>
    %165 = arith.mulf %164, %152 : vector<16x128xf32>
    %166 = math.tanh %165 : vector<16x128xf32>
    %cst_61 = arith.constant 1.000000e+00 : f32
    %167 = vector.broadcast %cst_61 : f32 to vector<16x128xf32>
    %168 = arith.addf %167, %166 : vector<16x128xf32>
    %cst_62 = arith.constant 5.000000e-01 : f32
    %169 = vector.broadcast %cst_62 : f32 to vector<16x128xf32>
    %170 = arith.mulf %169, %168 : vector<16x128xf32>
    %171 = arith.mulf %170, %126 : vector<16x128xf32>
    %172 = arith.addf %163, %171 : vector<16x128xf32>
    %cst_63 = arith.constant 5.000000e-01 : f32
    %173 = vector.broadcast %cst_63 : f32 to vector<16x128xf32>
    %174 = arith.mulf %173, %154 : vector<16x128xf32>
    %175 = math.tanh %174 : vector<16x128xf32>
    %cst_64 = arith.constant 1.000000e+00 : f32
    %176 = vector.broadcast %cst_64 : f32 to vector<16x128xf32>
    %177 = arith.addf %176, %175 : vector<16x128xf32>
    %cst_65 = arith.constant 5.000000e-01 : f32
    %178 = vector.broadcast %cst_65 : f32 to vector<16x128xf32>
    %179 = arith.mulf %178, %177 : vector<16x128xf32>
    %180 = math.tanh %172 : vector<16x128xf32>
    %181 = arith.mulf %179, %180 : vector<16x128xf32>
    %182 = arith.index_cast %c3_i32 : i32 to index
    %c0_66 = arith.constant 0 : index
    %c0_67 = arith.constant 0 : index
    %183 = vector.load %arg4[%182, %c0_66, %c0_67] : memref<8x16x128xf32, #tpu.memory_space<vmem>>, vector<1x16x128xf32>
    %184 = vector.shape_cast %183 : vector<1x16x128xf32> to vector<16x128xf32>
    %185 = vector.shape_cast %181 : vector<16x128xf32> to vector<1x16x128xf32>
    tpu.vector_store %arg4[%182, %c0_66, %c0_67], %185 {strides = array<i32>} : memref<8x16x128xf32, #tpu.memory_space<vmem>>, vector<1x16x128xf32>,
    %186 = arith.index_cast %c3_i32 : i32 to index
    %c0_68 = arith.constant 0 : index
    %c0_69 = arith.constant 0 : index
    %187 = vector.load %arg5[%186, %c0_68, %c0_69] : memref<8x16x128xf32, #tpu.memory_space<vmem>>, vector<1x16x128xf32>
    %188 = vector.shape_cast %187 : vector<1x16x128xf32> to vector<16x128xf32>
    %189 = vector.shape_cast %172 : vector<16x128xf32> to vector<1x16x128xf32>
    tpu.vector_store %arg5[%186, %c0_68, %c0_69], %189 {strides = array<i32>} : memref<8x16x128xf32, #tpu.memory_space<vmem>>, vector<1x16x128xf32>,
    %c4_i32 = arith.constant 4 : i32
    %190 = arith.index_cast %c4_i32 : i32 to index
    %c0_70 = arith.constant 0 : index
    %c0_71 = arith.constant 0 : index
    %191 = vector.load %arg2[%190, %c0_70, %c0_71] : memref<8x16x512xbf16, #tpu.memory_space<vmem>>, vector<1x16x512xbf16>
    %192 = vector.shape_cast %191 : vector<1x16x512xbf16> to vector<16x512xbf16>
    %193 = arith.extf %192 : vector<16x512xbf16> to vector<16x512xf32>
    %194 = arith.truncf %181 : vector<16x128xf32> to vector<16x128xbf16>
    %cst_72 = arith.constant dense<0.000000e+00> : vector<16x512xf32>
    %195 = tpu.matmul %194, %3, %cst_72 {dimension_numbers = #tpu.dot_dimension_numbers<[1], [0], [0], [1], [0, 0, 1, 1], [], []>} : vector<16x128xbf16>, vector<128x512xbf16>, vector<16x512xf32> -> vector<16x512xf32>
    %196 = arith.addf %193, %195 : vector<16x512xf32>
    %197 = vector.extract_strided_slice %196 {offsets = [0, 0], sizes = [16, 128], strides = [1, 1]} : vector<16x512xf32> to vector<16x128xf32>
    %198 = vector.extract_strided_slice %196 {offsets = [0, 128], sizes = [16, 128], strides = [1, 1]} : vector<16x512xf32> to vector<16x128xf32>
    %199 = vector.extract_strided_slice %196 {offsets = [0, 256], sizes = [16, 128], strides = [1, 1]} : vector<16x512xf32> to vector<16x128xf32>
    %200 = vector.extract_strided_slice %196 {offsets = [0, 384], sizes = [16, 128], strides = [1, 1]} : vector<16x512xf32> to vector<16x128xf32>
    %cst_73 = arith.constant 5.000000e-01 : f32
    %201 = vector.broadcast %cst_73 : f32 to vector<16x128xf32>
    %202 = arith.mulf %201, %197 : vector<16x128xf32>
    %203 = math.tanh %202 : vector<16x128xf32>
    %cst_74 = arith.constant 1.000000e+00 : f32
    %204 = vector.broadcast %cst_74 : f32 to vector<16x128xf32>
    %205 = arith.addf %204, %203 : vector<16x128xf32>
    %cst_75 = arith.constant 5.000000e-01 : f32
    %206 = vector.broadcast %cst_75 : f32 to vector<16x128xf32>
    %207 = arith.mulf %206, %205 : vector<16x128xf32>
    %208 = math.tanh %199 : vector<16x128xf32>
    %209 = arith.mulf %207, %208 : vector<16x128xf32>
    %cst_76 = arith.constant 5.000000e-01 : f32
    %210 = vector.broadcast %cst_76 : f32 to vector<16x128xf32>
    %211 = arith.mulf %210, %198 : vector<16x128xf32>
    %212 = math.tanh %211 : vector<16x128xf32>
    %cst_77 = arith.constant 1.000000e+00 : f32
    %213 = vector.broadcast %cst_77 : f32 to vector<16x128xf32>
    %214 = arith.addf %213, %212 : vector<16x128xf32>
    %cst_78 = arith.constant 5.000000e-01 : f32
    %215 = vector.broadcast %cst_78 : f32 to vector<16x128xf32>
    %216 = arith.mulf %215, %214 : vector<16x128xf32>
    %217 = arith.mulf %216, %172 : vector<16x128xf32>
    %218 = arith.addf %209, %217 : vector<16x128xf32>
    %cst_79 = arith.constant 5.000000e-01 : f32
    %219 = vector.broadcast %cst_79 : f32 to vector<16x128xf32>
    %220 = arith.mulf %219, %200 : vector<16x128xf32>
    %221 = math.tanh %220 : vector<16x128xf32>
    %cst_80 = arith.constant 1.000000e+00 : f32
    %222 = vector.broadcast %cst_80 : f32 to vector<16x128xf32>
    %223 = arith.addf %222, %221 : vector<16x128xf32>
    %cst_81 = arith.constant 5.000000e-01 : f32
    %224 = vector.broadcast %cst_81 : f32 to vector<16x128xf32>
    %225 = arith.mulf %224, %223 : vector<16x128xf32>
    %226 = math.tanh %218 : vector<16x128xf32>
    %227 = arith.mulf %225, %226 : vector<16x128xf32>
    %228 = arith.index_cast %c4_i32 : i32 to index
    %c0_82 = arith.constant 0 : index
    %c0_83 = arith.constant 0 : index
    %229 = vector.load %arg4[%228, %c0_82, %c0_83] : memref<8x16x128xf32, #tpu.memory_space<vmem>>, vector<1x16x128xf32>
    %230 = vector.shape_cast %229 : vector<1x16x128xf32> to vector<16x128xf32>
    %231 = vector.shape_cast %227 : vector<16x128xf32> to vector<1x16x128xf32>
    tpu.vector_store %arg4[%228, %c0_82, %c0_83], %231 {strides = array<i32>} : memref<8x16x128xf32, #tpu.memory_space<vmem>>, vector<1x16x128xf32>,
    %232 = arith.index_cast %c4_i32 : i32 to index
    %c0_84 = arith.constant 0 : index
    %c0_85 = arith.constant 0 : index
    %233 = vector.load %arg5[%232, %c0_84, %c0_85] : memref<8x16x128xf32, #tpu.memory_space<vmem>>, vector<1x16x128xf32>
    %234 = vector.shape_cast %233 : vector<1x16x128xf32> to vector<16x128xf32>
    %235 = vector.shape_cast %218 : vector<16x128xf32> to vector<1x16x128xf32>
    tpu.vector_store %arg5[%232, %c0_84, %c0_85], %235 {strides = array<i32>} : memref<8x16x128xf32, #tpu.memory_space<vmem>>, vector<1x16x128xf32>,
    %c5_i32 = arith.constant 5 : i32
    %236 = arith.index_cast %c5_i32 : i32 to index
    %c0_86 = arith.constant 0 : index
    %c0_87 = arith.constant 0 : index
    %237 = vector.load %arg2[%236, %c0_86, %c0_87] : memref<8x16x512xbf16, #tpu.memory_space<vmem>>, vector<1x16x512xbf16>
    %238 = vector.shape_cast %237 : vector<1x16x512xbf16> to vector<16x512xbf16>
    %239 = arith.extf %238 : vector<16x512xbf16> to vector<16x512xf32>
    %240 = arith.truncf %227 : vector<16x128xf32> to vector<16x128xbf16>
    %cst_88 = arith.constant dense<0.000000e+00> : vector<16x512xf32>
    %241 = tpu.matmul %240, %3, %cst_88 {dimension_numbers = #tpu.dot_dimension_numbers<[1], [0], [0], [1], [0, 0, 1, 1], [], []>} : vector<16x128xbf16>, vector<128x512xbf16>, vector<16x512xf32> -> vector<16x512xf32>
    %242 = arith.addf %239, %241 : vector<16x512xf32>
    %243 = vector.extract_strided_slice %242 {offsets = [0, 0], sizes = [16, 128], strides = [1, 1]} : vector<16x512xf32> to vector<16x128xf32>
    %244 = vector.extract_strided_slice %242 {offsets = [0, 128], sizes = [16, 128], strides = [1, 1]} : vector<16x512xf32> to vector<16x128xf32>
    %245 = vector.extract_strided_slice %242 {offsets = [0, 256], sizes = [16, 128], strides = [1, 1]} : vector<16x512xf32> to vector<16x128xf32>
    %246 = vector.extract_strided_slice %242 {offsets = [0, 384], sizes = [16, 128], strides = [1, 1]} : vector<16x512xf32> to vector<16x128xf32>
    %cst_89 = arith.constant 5.000000e-01 : f32
    %247 = vector.broadcast %cst_89 : f32 to vector<16x128xf32>
    %248 = arith.mulf %247, %243 : vector<16x128xf32>
    %249 = math.tanh %248 : vector<16x128xf32>
    %cst_90 = arith.constant 1.000000e+00 : f32
    %250 = vector.broadcast %cst_90 : f32 to vector<16x128xf32>
    %251 = arith.addf %250, %249 : vector<16x128xf32>
    %cst_91 = arith.constant 5.000000e-01 : f32
    %252 = vector.broadcast %cst_91 : f32 to vector<16x128xf32>
    %253 = arith.mulf %252, %251 : vector<16x128xf32>
    %254 = math.tanh %245 : vector<16x128xf32>
    %255 = arith.mulf %253, %254 : vector<16x128xf32>
    %cst_92 = arith.constant 5.000000e-01 : f32
    %256 = vector.broadcast %cst_92 : f32 to vector<16x128xf32>
    %257 = arith.mulf %256, %244 : vector<16x128xf32>
    %258 = math.tanh %257 : vector<16x128xf32>
    %cst_93 = arith.constant 1.000000e+00 : f32
    %259 = vector.broadcast %cst_93 : f32 to vector<16x128xf32>
    %260 = arith.addf %259, %258 : vector<16x128xf32>
    %cst_94 = arith.constant 5.000000e-01 : f32
    %261 = vector.broadcast %cst_94 : f32 to vector<16x128xf32>
    %262 = arith.mulf %261, %260 : vector<16x128xf32>
    %263 = arith.mulf %262, %218 : vector<16x128xf32>
    %264 = arith.addf %255, %263 : vector<16x128xf32>
    %cst_95 = arith.constant 5.000000e-01 : f32
    %265 = vector.broadcast %cst_95 : f32 to vector<16x128xf32>
    %266 = arith.mulf %265, %246 : vector<16x128xf32>
    %267 = math.tanh %266 : vector<16x128xf32>
    %cst_96 = arith.constant 1.000000e+00 : f32
    %268 = vector.broadcast %cst_96 : f32 to vector<16x128xf32>
    %269 = arith.addf %268, %267 : vector<16x128xf32>
    %cst_97 = arith.constant 5.000000e-01 : f32
    %270 = vector.broadcast %cst_97 : f32 to vector<16x128xf32>
    %271 = arith.mulf %270, %269 : vector<16x128xf32>
    %272 = math.tanh %264 : vector<16x128xf32>
    %273 = arith.mulf %271, %272 : vector<16x128xf32>
    %274 = arith.index_cast %c5_i32 : i32 to index
    %c0_98 = arith.constant 0 : index
    %c0_99 = arith.constant 0 : index
    %275 = vector.load %arg4[%274, %c0_98, %c0_99] : memref<8x16x128xf32, #tpu.memory_space<vmem>>, vector<1x16x128xf32>
    %276 = vector.shape_cast %275 : vector<1x16x128xf32> to vector<16x128xf32>
    %277 = vector.shape_cast %273 : vector<16x128xf32> to vector<1x16x128xf32>
    tpu.vector_store %arg4[%274, %c0_98, %c0_99], %277 {strides = array<i32>} : memref<8x16x128xf32, #tpu.memory_space<vmem>>, vector<1x16x128xf32>,
    %278 = arith.index_cast %c5_i32 : i32 to index
    %c0_100 = arith.constant 0 : index
    %c0_101 = arith.constant 0 : index
    %279 = vector.load %arg5[%278, %c0_100, %c0_101] : memref<8x16x128xf32, #tpu.memory_space<vmem>>, vector<1x16x128xf32>
    %280 = vector.shape_cast %279 : vector<1x16x128xf32> to vector<16x128xf32>
    %281 = vector.shape_cast %264 : vector<16x128xf32> to vector<1x16x128xf32>
    tpu.vector_store %arg5[%278, %c0_100, %c0_101], %281 {strides = array<i32>} : memref<8x16x128xf32, #tpu.memory_space<vmem>>, vector<1x16x128xf32>,
    %c6_i32 = arith.constant 6 : i32
    %282 = arith.index_cast %c6_i32 : i32 to index
    %c0_102 = arith.constant 0 : index
    %c0_103 = arith.constant 0 : index
    %283 = vector.load %arg2[%282, %c0_102, %c0_103] : memref<8x16x512xbf16, #tpu.memory_space<vmem>>, vector<1x16x512xbf16>
    %284 = vector.shape_cast %283 : vector<1x16x512xbf16> to vector<16x512xbf16>
    %285 = arith.extf %284 : vector<16x512xbf16> to vector<16x512xf32>
    %286 = arith.truncf %273 : vector<16x128xf32> to vector<16x128xbf16>
    %cst_104 = arith.constant dense<0.000000e+00> : vector<16x512xf32>
    %287 = tpu.matmul %286, %3, %cst_104 {dimension_numbers = #tpu.dot_dimension_numbers<[1], [0], [0], [1], [0, 0, 1, 1], [], []>} : vector<16x128xbf16>, vector<128x512xbf16>, vector<16x512xf32> -> vector<16x512xf32>
    %288 = arith.addf %285, %287 : vector<16x512xf32>
    %289 = vector.extract_strided_slice %288 {offsets = [0, 0], sizes = [16, 128], strides = [1, 1]} : vector<16x512xf32> to vector<16x128xf32>
    %290 = vector.extract_strided_slice %288 {offsets = [0, 128], sizes = [16, 128], strides = [1, 1]} : vector<16x512xf32> to vector<16x128xf32>
    %291 = vector.extract_strided_slice %288 {offsets = [0, 256], sizes = [16, 128], strides = [1, 1]} : vector<16x512xf32> to vector<16x128xf32>
    %292 = vector.extract_strided_slice %288 {offsets = [0, 384], sizes = [16, 128], strides = [1, 1]} : vector<16x512xf32> to vector<16x128xf32>
    %cst_105 = arith.constant 5.000000e-01 : f32
    %293 = vector.broadcast %cst_105 : f32 to vector<16x128xf32>
    %294 = arith.mulf %293, %289 : vector<16x128xf32>
    %295 = math.tanh %294 : vector<16x128xf32>
    %cst_106 = arith.constant 1.000000e+00 : f32
    %296 = vector.broadcast %cst_106 : f32 to vector<16x128xf32>
    %297 = arith.addf %296, %295 : vector<16x128xf32>
    %cst_107 = arith.constant 5.000000e-01 : f32
    %298 = vector.broadcast %cst_107 : f32 to vector<16x128xf32>
    %299 = arith.mulf %298, %297 : vector<16x128xf32>
    %300 = math.tanh %291 : vector<16x128xf32>
    %301 = arith.mulf %299, %300 : vector<16x128xf32>
    %cst_108 = arith.constant 5.000000e-01 : f32
    %302 = vector.broadcast %cst_108 : f32 to vector<16x128xf32>
    %303 = arith.mulf %302, %290 : vector<16x128xf32>
    %304 = math.tanh %303 : vector<16x128xf32>
    %cst_109 = arith.constant 1.000000e+00 : f32
    %305 = vector.broadcast %cst_109 : f32 to vector<16x128xf32>
    %306 = arith.addf %305, %304 : vector<16x128xf32>
    %cst_110 = arith.constant 5.000000e-01 : f32
    %307 = vector.broadcast %cst_110 : f32 to vector<16x128xf32>
    %308 = arith.mulf %307, %306 : vector<16x128xf32>
    %309 = arith.mulf %308, %264 : vector<16x128xf32>
    %310 = arith.addf %301, %309 : vector<16x128xf32>
    %cst_111 = arith.constant 5.000000e-01 : f32
    %311 = vector.broadcast %cst_111 : f32 to vector<16x128xf32>
    %312 = arith.mulf %311, %292 : vector<16x128xf32>
    %313 = math.tanh %312 : vector<16x128xf32>
    %cst_112 = arith.constant 1.000000e+00 : f32
    %314 = vector.broadcast %cst_112 : f32 to vector<16x128xf32>
    %315 = arith.addf %314, %313 : vector<16x128xf32>
    %cst_113 = arith.constant 5.000000e-01 : f32
    %316 = vector.broadcast %cst_113 : f32 to vector<16x128xf32>
    %317 = arith.mulf %316, %315 : vector<16x128xf32>
    %318 = math.tanh %310 : vector<16x128xf32>
    %319 = arith.mulf %317, %318 : vector<16x128xf32>
    %320 = arith.index_cast %c6_i32 : i32 to index
    %c0_114 = arith.constant 0 : index
    %c0_115 = arith.constant 0 : index
    %321 = vector.load %arg4[%320, %c0_114, %c0_115] : memref<8x16x128xf32, #tpu.memory_space<vmem>>, vector<1x16x128xf32>
    %322 = vector.shape_cast %321 : vector<1x16x128xf32> to vector<16x128xf32>
    %323 = vector.shape_cast %319 : vector<16x128xf32> to vector<1x16x128xf32>
    tpu.vector_store %arg4[%320, %c0_114, %c0_115], %323 {strides = array<i32>} : memref<8x16x128xf32, #tpu.memory_space<vmem>>, vector<1x16x128xf32>,
    %324 = arith.index_cast %c6_i32 : i32 to index
    %c0_116 = arith.constant 0 : index
    %c0_117 = arith.constant 0 : index
    %325 = vector.load %arg5[%324, %c0_116, %c0_117] : memref<8x16x128xf32, #tpu.memory_space<vmem>>, vector<1x16x128xf32>
    %326 = vector.shape_cast %325 : vector<1x16x128xf32> to vector<16x128xf32>
    %327 = vector.shape_cast %310 : vector<16x128xf32> to vector<1x16x128xf32>
    tpu.vector_store %arg5[%324, %c0_116, %c0_117], %327 {strides = array<i32>} : memref<8x16x128xf32, #tpu.memory_space<vmem>>, vector<1x16x128xf32>,
    %c7_i32 = arith.constant 7 : i32
    %328 = arith.index_cast %c7_i32 : i32 to index
    %c0_118 = arith.constant 0 : index
    %c0_119 = arith.constant 0 : index
    %329 = vector.load %arg2[%328, %c0_118, %c0_119] : memref<8x16x512xbf16, #tpu.memory_space<vmem>>, vector<1x16x512xbf16>
    %330 = vector.shape_cast %329 : vector<1x16x512xbf16> to vector<16x512xbf16>
    %331 = arith.extf %330 : vector<16x512xbf16> to vector<16x512xf32>
    %332 = arith.truncf %319 : vector<16x128xf32> to vector<16x128xbf16>
    %cst_120 = arith.constant dense<0.000000e+00> : vector<16x512xf32>
    %333 = tpu.matmul %332, %3, %cst_120 {dimension_numbers = #tpu.dot_dimension_numbers<[1], [0], [0], [1], [0, 0, 1, 1], [], []>} : vector<16x128xbf16>, vector<128x512xbf16>, vector<16x512xf32> -> vector<16x512xf32>
    %334 = arith.addf %331, %333 : vector<16x512xf32>
    %335 = vector.extract_strided_slice %334 {offsets = [0, 0], sizes = [16, 128], strides = [1, 1]} : vector<16x512xf32> to vector<16x128xf32>
    %336 = vector.extract_strided_slice %334 {offsets = [0, 128], sizes = [16, 128], strides = [1, 1]} : vector<16x512xf32> to vector<16x128xf32>
    %337 = vector.extract_strided_slice %334 {offsets = [0, 256], sizes = [16, 128], strides = [1, 1]} : vector<16x512xf32> to vector<16x128xf32>
    %338 = vector.extract_strided_slice %334 {offsets = [0, 384], sizes = [16, 128], strides = [1, 1]} : vector<16x512xf32> to vector<16x128xf32>
    %cst_121 = arith.constant 5.000000e-01 : f32
    %339 = vector.broadcast %cst_121 : f32 to vector<16x128xf32>
    %340 = arith.mulf %339, %335 : vector<16x128xf32>
    %341 = math.tanh %340 : vector<16x128xf32>
    %cst_122 = arith.constant 1.000000e+00 : f32
    %342 = vector.broadcast %cst_122 : f32 to vector<16x128xf32>
    %343 = arith.addf %342, %341 : vector<16x128xf32>
    %cst_123 = arith.constant 5.000000e-01 : f32
    %344 = vector.broadcast %cst_123 : f32 to vector<16x128xf32>
    %345 = arith.mulf %344, %343 : vector<16x128xf32>
    %346 = math.tanh %337 : vector<16x128xf32>
    %347 = arith.mulf %345, %346 : vector<16x128xf32>
    %cst_124 = arith.constant 5.000000e-01 : f32
    %348 = vector.broadcast %cst_124 : f32 to vector<16x128xf32>
    %349 = arith.mulf %348, %336 : vector<16x128xf32>
    %350 = math.tanh %349 : vector<16x128xf32>
    %cst_125 = arith.constant 1.000000e+00 : f32
    %351 = vector.broadcast %cst_125 : f32 to vector<16x128xf32>
    %352 = arith.addf %351, %350 : vector<16x128xf32>
    %cst_126 = arith.constant 5.000000e-01 : f32
    %353 = vector.broadcast %cst_126 : f32 to vector<16x128xf32>
    %354 = arith.mulf %353, %352 : vector<16x128xf32>
    %355 = arith.mulf %354, %310 : vector<16x128xf32>
    %356 = arith.addf %347, %355 : vector<16x128xf32>
    %cst_127 = arith.constant 5.000000e-01 : f32
    %357 = vector.broadcast %cst_127 : f32 to vector<16x128xf32>
    %358 = arith.mulf %357, %338 : vector<16x128xf32>
    %359 = math.tanh %358 : vector<16x128xf32>
    %cst_128 = arith.constant 1.000000e+00 : f32
    %360 = vector.broadcast %cst_128 : f32 to vector<16x128xf32>
    %361 = arith.addf %360, %359 : vector<16x128xf32>
    %cst_129 = arith.constant 5.000000e-01 : f32
    %362 = vector.broadcast %cst_129 : f32 to vector<16x128xf32>
    %363 = arith.mulf %362, %361 : vector<16x128xf32>
    %364 = math.tanh %356 : vector<16x128xf32>
    %365 = arith.mulf %363, %364 : vector<16x128xf32>
    %366 = arith.index_cast %c7_i32 : i32 to index
    %c0_130 = arith.constant 0 : index
    %c0_131 = arith.constant 0 : index
    %367 = vector.load %arg4[%366, %c0_130, %c0_131] : memref<8x16x128xf32, #tpu.memory_space<vmem>>, vector<1x16x128xf32>
    %368 = vector.shape_cast %367 : vector<1x16x128xf32> to vector<16x128xf32>
    %369 = vector.shape_cast %365 : vector<16x128xf32> to vector<1x16x128xf32>
    tpu.vector_store %arg4[%366, %c0_130, %c0_131], %369 {strides = array<i32>} : memref<8x16x128xf32, #tpu.memory_space<vmem>>, vector<1x16x128xf32>,
    %370 = arith.index_cast %c7_i32 : i32 to index
    %c0_132 = arith.constant 0 : index
    %c0_133 = arith.constant 0 : index
    %371 = vector.load %arg5[%370, %c0_132, %c0_133] : memref<8x16x128xf32, #tpu.memory_space<vmem>>, vector<1x16x128xf32>
    %372 = vector.shape_cast %371 : vector<1x16x128xf32> to vector<16x128xf32>
    %373 = vector.shape_cast %356 : vector<16x128xf32> to vector<1x16x128xf32>
    tpu.vector_store %arg5[%370, %c0_132, %c0_133], %373 {strides = array<i32>} : memref<8x16x128xf32, #tpu.memory_space<vmem>>, vector<1x16x128xf32>,
    %c8_i32 = arith.constant 8 : i32
    %c0_134 = arith.constant 0 : index
    %c0_135 = arith.constant 0 : index
    %374 = vector.load %arg6[%c0_134, %c0_135] : memref<16x128xf32, #tpu.memory_space<vmem>>, vector<16x128xf32>
    tpu.vector_store %arg6[%c0_134, %c0_135], %365 {strides = array<i32>} : memref<16x128xf32, #tpu.memory_space<vmem>>, vector<16x128xf32>,
    %c0_136 = arith.constant 0 : index
    %c0_137 = arith.constant 0 : index
    %375 = vector.load %arg7[%c0_136, %c0_137] : memref<16x128xf32, #tpu.memory_space<vmem>>, vector<16x128xf32>
    tpu.vector_store %arg7[%c0_136, %c0_137], %356 {strides = array<i32>} : memref<16x128xf32, #tpu.memory_space<vmem>>, vector<16x128xf32>,
    return
  }
  func.func @transform_0(%arg0: i32, %arg1: i32) -> (i32, i32, i32) {
    %c0_i32 = arith.constant 0 : i32
    %c0_i32_0 = arith.constant 0 : i32
    return %arg1, %arg0, %c0_i32 : i32, i32, i32
  }
  func.func @transform_1(%arg0: i32, %arg1: i32) -> (i32, i32) {
    %c0_i32 = arith.constant 0 : i32
    %c0_i32_0 = arith.constant 0 : i32
    %c0_i32_1 = arith.constant 0 : i32
    return %c0_i32, %c0_i32_0 : i32, i32
  }
  func.func @transform_2(%arg0: i32, %arg1: i32) -> (i32, i32, i32) {
    %c0_i32 = arith.constant 0 : i32
    %c0_i32_0 = arith.constant 0 : i32
    return %arg1, %arg0, %c0_i32 : i32, i32, i32
  }
  func.func @transform_3(%arg0: i32, %arg1: i32) -> (i32, i32, i32) {
    %c0_i32 = arith.constant 0 : i32
    %c0_i32_0 = arith.constant 0 : i32
    return %arg1, %arg0, %c0_i32 : i32, i32, i32
  }
}

</mosaic_0001>

<llo_original>
// kernel: tpu_custom_call.1
$region0: #{tpu_custom_call.1}
  #allocation0 [shape = 'u32[]', space=smem, size = 0x4, offset = 0x4, fixed_abs, tag = 'smem constant byte address 0x4 - core index']
  #allocation1 [shape = 'u32[72,128]{1,0:T(1,128)}', space=vmem, size = 0x9000, scoped, tag = 'internal scratch']
  #allocation2 [shape = 'f32[16,128]{1,0:T(8,128)}', space=vmem, size = 0x2000, scoped, tag = 'scratch operand']
  #allocation3 [shape = 'f32[16,128]{1,0:T(8,128)}', space=vmem, size = 0x2000, scoped, tag = 'scratch operand']
  %s0 = inlined_call_operand.hbm [shape: bf16[8,16,512], index: 0, kind: input, shape index: {}]
  %s1 = inlined_call_operand.hbm [shape: bf16[128,512], index: 1, kind: input, shape index: {}]
  %s2 = inlined_call_operand.hbm [shape: f32[8,16,128], index: 2, kind: output, shape index: {0}]
  %s3 = inlined_call_operand.hbm [shape: f32[8,16,128], index: 3, kind: output, shape index: {1}]
  %4 = xla_tuple %s2, %s3
  %s5 = sld [smem:[#allocation0]]
  $region38: #{tpu_custom_call.1} parent=0
    _
  %s7 = ssub.s32 1, %s5
  %s8 = scalar_select 0, %s7, %s5
  $region1: #{tpu_custom_call.1} parent=0
    #allocation4 [shape = 'u8[131072]{0}', space=vmem, size = 0x20000, scoped, tag = 'input window, operand 0, single buffered']
    #allocation5 [shape = 's32[1]{0}', space=sflag, size = 0x4, scoped, tag = 'scoped memory for tpu_custom_call.1']
    #allocation6 [shape = 's32[1]{0}', space=sflag, size = 0x4, scoped, tag = 'scoped memory for tpu_custom_call.1']
    #allocation7 [shape = 'u8[131072]{0}', space=vmem, size = 0x20000, scoped, tag = 'input window, operand 1, single buffered']
    #allocation8 [shape = 's32[1]{0}', space=sflag, size = 0x4, scoped, tag = 'scoped memory for tpu_custom_call.1']
    #allocation9 [shape = 'u8[65536]{0}', space=vmem, size = 0x10000, scoped, tag = 'output window, operand 0, single buffered']
    #allocation10 [shape = 'u8[65536]{0}', space=vmem, size = 0x10000, scoped, tag = 'output window, operand 1, single buffered']
    #allocation11 [shape = 's32[1]{0}', space=sflag, size = 0x4, scoped, tag = 'scoped memory for tpu_custom_call.1']
    %9 = vsyncpa [#allocation5], 0
    %10 = vsyncpa [#allocation8], 0
    %11 = vsyncpa [#allocation6], 0
    %12 = vsyncpa [#allocation11], 0
    // Predicated region
    $region2: #{tpu_custom_call.1} parent=1 // pred_check
      _
    $region3: #{tpu_custom_call.1} parent=1 // pred_check_branch
      %14 = sbr.rel (0) target = $region5
    $region4: #{tpu_custom_call.1} parent=1 // pred_region
      %16 = vsyncadd [#allocation5], 0
      %s17 = sshll.u32 %s0, 4
      %s18 = int_to_ptr.hbm [resolvable:$true] %s17
      %s19 = sshll.u32 [#allocation4], 4
      %s20 = int_to_ptr.vmem [resolvable:$true] %s19
      %25 = dma.hbm_to_vmem [thread:$0]  %s18, 4096, %s20, [#allocation5], 256, 256, 16
    $region5: #{tpu_custom_call.1} parent=1 // pred_fallthru
      _
    // Predicated region
    $region6: #{tpu_custom_call.1} parent=1 // pred_check
      _
    $region7: #{tpu_custom_call.1} parent=1 // pred_check_branch
      %27 = sbr.rel (0) target = $region9
    $region8: #{tpu_custom_call.1} parent=1 // pred_region
      %29 = vsyncadd [#allocation8], 0
      %s30 = sshll.u32 %s1, 4
      %s31 = int_to_ptr.hbm [resolvable:$true] %s30
      %s32 = sshll.u32 [#allocation7], 4
      %s33 = int_to_ptr.vmem [resolvable:$true] %s32
      %38 = dma.hbm_to_vmem [thread:$0]  %s31, 4096, %s33, [#allocation8], 256, 256, 16
    $region9: #{tpu_custom_call.1} parent=1 // pred_fallthru
      _
    // Predicated region
    $region10: #{tpu_custom_call.1} parent=1 // pred_check
      _
    $region11: #{tpu_custom_call.1} parent=1 // pred_check_branch
      %40 = sbr.rel (0) target = $region13
    $region12: #{tpu_custom_call.1} parent=1 // pred_region
      %42 = dma.done [#allocation5], 4096
    $region13: #{tpu_custom_call.1} parent=1 // pred_fallthru
      _
    // Predicated region
    $region14: #{tpu_custom_call.1} parent=1 // pred_check
      _
    $region15: #{tpu_custom_call.1} parent=1 // pred_check_branch
      %44 = sbr.rel (0) target = $region17
    $region16: #{tpu_custom_call.1} parent=1 // pred_region
      %46 = dma.done [#allocation8], 4096
    $region17: #{tpu_custom_call.1} parent=1 // pred_fallthru
      _
    %p47 = scmp.eq.s32.totalorder 0, 0
    // Predicated region
    $region18: #{tpu_custom_call.1} parent=1 // pred_check
      %p48 = pneg %p47
    $region19: #{tpu_custom_call.1} parent=1 // pred_check_branch
      %50 = sbr.rel (%p48) target = $region21
    $region20: #{tpu_custom_call.1} parent=1 // pred_region
      %51 = vst [vmem:[#allocation2] sm:$0xff] 0.0
      %52 = vst [vmem:[#allocation2 + $0x8] sm:$0xff] 0.0
      %53 = vst [vmem:[#allocation3] sm:$0xff] 0.0
      %54 = vst [vmem:[#allocation3 + $0x8] sm:$0xff] 0.0
    $region21: #{tpu_custom_call.1} parent=1 // pred_fallthru
      _
    %v55 = vld [vmem:[#allocation7] sm:$0xff]
    %v56 = vld [vmem:[#allocation7 + $0x8] sm:$0xff]
    %v57 = vld [vmem:[#allocation7 + $0x10] sm:$0xff]
    %v58 = vld [vmem:[#allocation7 + $0x18] sm:$0xff]
    %v59 = vld [vmem:[#allocation7 + $0x20] sm:$0xff]
    %v60 = vld [vmem:[#allocation7 + $0x28] sm:$0xff]
    %v61 = vld [vmem:[#allocation7 + $0x30] sm:$0xff]
    %v62 = vld [vmem:[#allocation7 + $0x38] sm:$0xff]
    %v63 = vld [vmem:[#allocation7 + $0x40] sm:$0xff]
    %v64 = vld [vmem:[#allocation7 + $0x48] sm:$0xff]
    %v65 = vld [vmem:[#allocation7 + $0x50] sm:$0xff]
    %v66 = vld [vmem:[#allocation7 + $0x58] sm:$0xff]
    %v67 = vld [vmem:[#allocation7 + $0x60] sm:$0xff]
    %v68 = vld [vmem:[#allocation7 + $0x68] sm:$0xff]
    %v69 = vld [vmem:[#allocation7 + $0x70] sm:$0xff]
    %v70 = vld [vmem:[#allocation7 + $0x78] sm:$0xff]
    %v71 = vld [vmem:[#allocation7 + $0x80] sm:$0xff]
    %v72 = vld [vmem:[#allocation7 + $0x88] sm:$0xff]
    %v73 = vld [vmem:[#allocation7 + $0x90] sm:$0xff]
    %v74 = vld [vmem:[#allocation7 + $0x98] sm:$0xff]
    %v75 = vld [vmem:[#allocation7 + $0xa0] sm:$0xff]
    %v76 = vld [vmem:[#allocation7 + $0xa8] sm:$0xff]
    %v77 = vld [vmem:[#allocation7 + $0xb0] sm:$0xff]
    %v78 = vld [vmem:[#allocation7 + $0xb8] sm:$0xff]
    %v79 = vld [vmem:[#allocation7 + $0xc0] sm:$0xff]
    %v80 = vld [vmem:[#allocation7 + $0xc8] sm:$0xff]
    %v81 = vld [vmem:[#allocation7 + $0xd0] sm:$0xff]
    %v82 = vld [vmem:[#allocation7 + $0xd8] sm:$0xff]
    %v83 = vld [vmem:[#allocation7 + $0xe0] sm:$0xff]
    %v84 = vld [vmem:[#allocation7 + $0xe8] sm:$0xff]
    %v85 = vld [vmem:[#allocation7 + $0xf0] sm:$0xff]
    %v86 = vld [vmem:[#allocation7 + $0xf8] sm:$0xff]
    %v87 = vld [vmem:[#allocation2] sm:$0xff]
    %v88 = vld [vmem:[#allocation2 + $0x8] sm:$0xff]
    %v89 = vld [vmem:[#allocation3] sm:$0xff]
    %v90 = vld [vmem:[#allocation3 + $0x8] sm:$0xff]
    %v91 = vld [vmem:[#allocation4] sm:$0xff]
    %v92 = vld [vmem:[#allocation4 + $0x8] sm:$0xff]
    %v93 = vld [vmem:[#allocation4 + $0x10] sm:$0xff]
    %v94 = vld [vmem:[#allocation4 + $0x18] sm:$0xff]
    %v95 = vunpack.c.l.bf16 %v91
    %v96 = vunpack.c.h.bf16 %v91
    %v97 = vunpack.c.l.bf16 %v92
    %v98 = vunpack.c.h.bf16 %v92
    %v99 = vunpack.c.l.bf16 %v93
    %v100 = vunpack.c.h.bf16 %v93
    %v101 = vunpack.c.l.bf16 %v94
    %v102 = vunpack.c.h.bf16 %v94
    %v103 = vpack.c.bf16 %v88, %v87
    %v136 = vunpack.c.l.b16 %v55
    %v137 = vunpack.c.h.b16 %v55
    %v138 = vunpack.c.l.b16 %v56
    %v139 = vunpack.c.h.b16 %v56
    %v140 = vunpack.c.l.b16 %v57
    %v141 = vunpack.c.h.b16 %v57
    %v142 = vunpack.c.l.b16 %v58
    %v143 = vunpack.c.h.b16 %v58
    %v144 = vunpack.c.l.b16 %v59
    %v145 = vunpack.c.h.b16 %v59
    %v146 = vunpack.c.l.b16 %v60
    %v147 = vunpack.c.h.b16 %v60
    %v148 = vunpack.c.l.b16 %v61
    %v149 = vunpack.c.h.b16 %v61
    %v150 = vunpack.c.l.b16 %v62
    %v151 = vunpack.c.h.b16 %v62
    %v152 = vunpack.c.l.b16 %v63
    %v153 = vunpack.c.h.b16 %v63
    %v154 = vunpack.c.l.b16 %v64
    %v155 = vunpack.c.h.b16 %v64
    %v156 = vunpack.c.l.b16 %v65
    %v157 = vunpack.c.h.b16 %v65
    %v158 = vunpack.c.l.b16 %v66
    %v159 = vunpack.c.h.b16 %v66
    %v160 = vunpack.c.l.b16 %v67
    %v161 = vunpack.c.h.b16 %v67
    %v162 = vunpack.c.l.b16 %v68
    %v163 = vunpack.c.h.b16 %v68
    %v164 = vunpack.c.l.b16 %v69
    %v165 = vunpack.c.h.b16 %v69
    %v166 = vunpack.c.l.b16 %v70
    %v167 = vunpack.c.h.b16 %v70
    %v168 = vunpack.c.l.b16 %v71
    %v169 = vunpack.c.h.b16 %v71
    %v170 = vunpack.c.l.b16 %v72
    %v171 = vunpack.c.h.b16 %v72
    %v172 = vunpack.c.l.b16 %v73
    %v173 = vunpack.c.h.b16 %v73
    %v174 = vunpack.c.l.b16 %v74
    %v175 = vunpack.c.h.b16 %v74
    %v176 = vunpack.c.l.b16 %v75
    %v177 = vunpack.c.h.b16 %v75
    %v178 = vunpack.c.l.b16 %v76
    %v179 = vunpack.c.h.b16 %v76
    %v180 = vunpack.c.l.b16 %v77
    %v181 = vunpack.c.h.b16 %v77
    %v182 = vunpack.c.l.b16 %v78
    %v183 = vunpack.c.h.b16 %v78
    %v184 = vunpack.c.l.b16 %v79
    %v185 = vunpack.c.h.b16 %v79
    %v186 = vunpack.c.l.b16 %v80
    %v187 = vunpack.c.h.b16 %v80
    %v188 = vunpack.c.l.b16 %v81
    %v189 = vunpack.c.h.b16 %v81
    %v190 = vunpack.c.l.b16 %v82
    %v191 = vunpack.c.h.b16 %v82
    %v192 = vunpack.c.l.b16 %v83
    %v193 = vunpack.c.h.b16 %v83
    %v194 = vunpack.c.l.b16 %v84
    %v195 = vunpack.c.h.b16 %v84
    %v196 = vunpack.c.l.b16 %v85
    %v197 = vunpack.c.h.b16 %v85
    %v198 = vunpack.c.l.b16 %v86
    %v199 = vunpack.c.h.b16 %v86
    %v200 = vpack.c.b16 %v140, %v136
    %v201 = vpack.c.b16 %v141, %v137
    %v202 = vpack.c.b16 %v142, %v138
    %v203 = vpack.c.b16 %v143, %v139
    %v204 = vpack.c.b16 %v148, %v144
    %v205 = vpack.c.b16 %v149, %v145
    %v206 = vpack.c.b16 %v150, %v146
    %v207 = vpack.c.b16 %v151, %v147
    %v208 = vpack.c.b16 %v156, %v152
    %v209 = vpack.c.b16 %v157, %v153
    %v210 = vpack.c.b16 %v158, %v154
    %v211 = vpack.c.b16 %v159, %v155
    %v212 = vpack.c.b16 %v164, %v160
    %v213 = vpack.c.b16 %v165, %v161
    %v214 = vpack.c.b16 %v166, %v162
    %v215 = vpack.c.b16 %v167, %v163
    %v216 = vpack.c.b16 %v172, %v168
    %v217 = vpack.c.b16 %v173, %v169
    %v218 = vpack.c.b16 %v174, %v170
    %v219 = vpack.c.b16 %v175, %v171
    %v220 = vpack.c.b16 %v180, %v176
    %v221 = vpack.c.b16 %v181, %v177
    %v222 = vpack.c.b16 %v182, %v178
    %v223 = vpack.c.b16 %v183, %v179
    %v224 = vpack.c.b16 %v188, %v184
    %v225 = vpack.c.b16 %v189, %v185
    %v226 = vpack.c.b16 %v190, %v186
    %v227 = vpack.c.b16 %v191, %v187
    %v228 = vpack.c.b16 %v196, %v192
    %v229 = vpack.c.b16 %v197, %v193
    %v230 = vpack.c.b16 %v198, %v194
    %v231 = vpack.c.b16 %v199, %v195
    %264 = vmatpush.bf16.msra.mxu0 %v228
    %265 = vmatpush.bf16.msra.mxu0 %v224
    %266 = vmatpush.bf16.msra.mxu0 %v220
    %267 = vmatpush.bf16.msra.mxu0 %v216
    %268 = vmatpush.bf16.msra.mxu0 %v212
    %269 = vmatpush.bf16.msra.mxu0 %v208
    %270 = vmatpush.bf16.msra.mxu0 %v204
    %271 = vmatpush.bf16.msra.mxu0 %v200
    %272 = vmatmul.bf16.gmra.mxu0 %v103
    %v273 = vpop.f32.mrf.mxu0
    %v274 = vadd.f32 0.0, %v273
    %v275 = vpop.f32.mrf.mxu0
    %v276 = vadd.f32 0.0, %v275
    %277 = vdwg.mxu0
    %278 = vmatpush.bf16.msra.mxu0 %v229
    %279 = vmatpush.bf16.msra.mxu0 %v225
    %280 = vmatpush.bf16.msra.mxu0 %v221
    %281 = vmatpush.bf16.msra.mxu0 %v217
    %282 = vmatpush.bf16.msra.mxu0 %v213
    %283 = vmatpush.bf16.msra.mxu0 %v209
    %284 = vmatpush.bf16.msra.mxu0 %v205
    %285 = vmatpush.bf16.msra.mxu0 %v201
    %286 = vmatmul.bf16.gmra.mxu0 %v103
    %v287 = vpop.f32.mrf.mxu0
    %v288 = vadd.f32 0.0, %v287
    %v289 = vpop.f32.mrf.mxu0
    %v290 = vadd.f32 0.0, %v289
    %291 = vdwg.mxu0
    %292 = vmatpush.bf16.msra.mxu0 %v230
    %293 = vmatpush.bf16.msra.mxu0 %v226
    %294 = vmatpush.bf16.msra.mxu0 %v222
    %295 = vmatpush.bf16.msra.mxu0 %v218
    %296 = vmatpush.bf16.msra.mxu0 %v214
    %297 = vmatpush.bf16.msra.mxu0 %v210
    %298 = vmatpush.bf16.msra.mxu0 %v206
    %299 = vmatpush.bf16.msra.mxu0 %v202
    %300 = vmatmul.bf16.gmra.mxu0 %v103
    %v301 = vpop.f32.mrf.mxu0
    %v302 = vadd.f32 0.0, %v301
    %v303 = vpop.f32.mrf.mxu0
    %v304 = vadd.f32 0.0, %v303
    %305 = vdwg.mxu0
    %306 = vmatpush.bf16.msra.mxu0 %v231
    %307 = vmatpush.bf16.msra.mxu0 %v227
    %308 = vmatpush.bf16.msra.mxu0 %v223
    %309 = vmatpush.bf16.msra.mxu0 %v219
    %310 = vmatpush.bf16.msra.mxu0 %v215
    %311 = vmatpush.bf16.msra.mxu0 %v211
    %312 = vmatpush.bf16.msra.mxu0 %v207
    %313 = vmatpush.bf16.msra.mxu0 %v203
    %314 = vmatmul.bf16.gmra.mxu0 %v103
    %v315 = vpop.f32.mrf.mxu0
    %v316 = vadd.f32 0.0, %v315
    %v317 = vpop.f32.mrf.mxu0
    %v318 = vadd.f32 0.0, %v317
    %319 = vdwg.mxu0
    %v320 = vadd.f32 %v95, %v274
    %v321 = vadd.f32 %v96, %v288
    %v322 = vadd.f32 %v97, %v302
    %v323 = vadd.f32 %v98, %v316
    %v324 = vadd.f32 %v99, %v276
    %v325 = vadd.f32 %v100, %v290
    %v326 = vadd.f32 %v101, %v304
    %v327 = vadd.f32 %v102, %v318
    %v328 = vmul.f32 %v320, 0.5
    %v329 = vmul.f32 %v324, 0.5
    %v330 = vtanh.pop %v328
    %v331 = vtanh.pop %v329
    %v332 = vadd.f32 %v330, 1.0
    %v333 = vadd.f32 %v331, 1.0
    %v334 = vmul.f32 %v332, 0.5
    %v335 = vmul.f32 %v333, 0.5
    %v336 = vtanh.pop %v322
    %v337 = vtanh.pop %v326
    %v338 = vmul.f32 %v334, %v336
    %v339 = vmul.f32 %v335, %v337
    %v340 = vmul.f32 %v321, 0.5
    %v341 = vmul.f32 %v325, 0.5
    %v342 = vtanh.pop %v340
    %v343 = vtanh.pop %v341
    %v344 = vadd.f32 %v342, 1.0
    %v345 = vadd.f32 %v343, 1.0
    %v346 = vmul.f32 %v344, 0.5
    %v347 = vmul.f32 %v345, 0.5
    %v348 = vmul.f32 %v346, %v89
    %v349 = vmul.f32 %v347, %v90
    %v350 = vadd.f32 %v338, %v348
    %v351 = vadd.f32 %v339, %v349
    %v352 = vmul.f32 %v323, 0.5
    %v353 = vmul.f32 %v327, 0.5
    %v354 = vtanh.pop %v352
    %v355 = vtanh.pop %v353
    %v356 = vadd.f32 %v354, 1.0
    %v357 = vadd.f32 %v355, 1.0
    %v358 = vmul.f32 %v356, 0.5
    %v359 = vmul.f32 %v357, 0.5
    %v360 = vtanh.pop %v350
    %v361 = vtanh.pop %v351
    %v362 = vmul.f32 %v358, %v360
    %v363 = vmul.f32 %v359, %v361
    %364 = vst [vmem:[#allocation9] sm:$0xff] %v362
    %365 = vst [vmem:[#allocation9 + $0x8] sm:$0xff] %v363
    %366 = vst [vmem:[#allocation10] sm:$0xff] %v350
    %367 = vst [vmem:[#allocation10 + $0x8] sm:$0xff] %v351
    %s368 = scalar_lea.vmem [#allocation4], 32
    %v369 = vld [vmem:[%s368] sm:$0xff]
    %v370 = vld [vmem:[%s368 + $0x8] sm:$0xff]
    %v371 = vld [vmem:[%s368 + $0x10] sm:$0xff]
    %v372 = vld [vmem:[%s368 + $0x18] sm:$0xff]
    %v373 = vunpack.c.l.bf16 %v369
    %v374 = vunpack.c.h.bf16 %v369
    %v375 = vunpack.c.l.bf16 %v370
    %v376 = vunpack.c.h.bf16 %v370
    %v377 = vunpack.c.l.bf16 %v371
    %v378 = vunpack.c.h.bf16 %v371
    %v379 = vunpack.c.l.bf16 %v372
    %v380 = vunpack.c.h.bf16 %v372
    %v381 = vpack.c.bf16 %v363, %v362
    %382 = vmatpush.bf16.msra.mxu0 %v228
    %383 = vmatpush.bf16.msra.mxu0 %v224
    %384 = vmatpush.bf16.msra.mxu0 %v220
    %385 = vmatpush.bf16.msra.mxu0 %v216
    %386 = vmatpush.bf16.msra.mxu0 %v212
    %387 = vmatpush.bf16.msra.mxu0 %v208
    %388 = vmatpush.bf16.msra.mxu0 %v204
    %389 = vmatpush.bf16.msra.mxu0 %v200
    %390 = vmatmul.bf16.gmra.mxu0 %v381
    %v391 = vpop.f32.mrf.mxu0
    %v392 = vadd.f32 0.0, %v391
    %v393 = vpop.f32.mrf.mxu0
    %v394 = vadd.f32 0.0, %v393
    %395 = vdwg.mxu0
    %396 = vmatpush.bf16.msra.mxu0 %v229
    %397 = vmatpush.bf16.msra.mxu0 %v225
    %398 = vmatpush.bf16.msra.mxu0 %v221
    %399 = vmatpush.bf16.msra.mxu0 %v217
    %400 = vmatpush.bf16.msra.mxu0 %v213
    %401 = vmatpush.bf16.msra.mxu0 %v209
    %402 = vmatpush.bf16.msra.mxu0 %v205
    %403 = vmatpush.bf16.msra.mxu0 %v201
    %404 = vmatmul.bf16.gmra.mxu0 %v381
    %v405 = vpop.f32.mrf.mxu0
    %v406 = vadd.f32 0.0, %v405
    %v407 = vpop.f32.mrf.mxu0
    %v408 = vadd.f32 0.0, %v407
    %409 = vdwg.mxu0
    %410 = vmatpush.bf16.msra.mxu0 %v230
    %411 = vmatpush.bf16.msra.mxu0 %v226
    %412 = vmatpush.bf16.msra.mxu0 %v222
    %413 = vmatpush.bf16.msra.mxu0 %v218
    %414 = vmatpush.bf16.msra.mxu0 %v214
    %415 = vmatpush.bf16.msra.mxu0 %v210
    %416 = vmatpush.bf16.msra.mxu0 %v206
    %417 = vmatpush.bf16.msra.mxu0 %v202
    %418 = vmatmul.bf16.gmra.mxu0 %v381
    %v419 = vpop.f32.mrf.mxu0
    %v420 = vadd.f32 0.0, %v419
    %v421 = vpop.f32.mrf.mxu0
    %v422 = vadd.f32 0.0, %v421
    %423 = vdwg.mxu0
    %424 = vmatpush.bf16.msra.mxu0 %v231
    %425 = vmatpush.bf16.msra.mxu0 %v227
    %426 = vmatpush.bf16.msra.mxu0 %v223
    %427 = vmatpush.bf16.msra.mxu0 %v219
    %428 = vmatpush.bf16.msra.mxu0 %v215
    %429 = vmatpush.bf16.msra.mxu0 %v211
    %430 = vmatpush.bf16.msra.mxu0 %v207
    %431 = vmatpush.bf16.msra.mxu0 %v203
    %432 = vmatmul.bf16.gmra.mxu0 %v381
    %v433 = vpop.f32.mrf.mxu0
    %v434 = vadd.f32 0.0, %v433
    %v435 = vpop.f32.mrf.mxu0
    %v436 = vadd.f32 0.0, %v435
    %437 = vdwg.mxu0
    %v438 = vadd.f32 %v373, %v392
    %v439 = vadd.f32 %v374, %v406
    %v440 = vadd.f32 %v375, %v420
    %v441 = vadd.f32 %v376, %v434
    %v442 = vadd.f32 %v377, %v394
    %v443 = vadd.f32 %v378, %v408
    %v444 = vadd.f32 %v379, %v422
    %v445 = vadd.f32 %v380, %v436
    %v446 = vmul.f32 %v438, 0.5
    %v447 = vmul.f32 %v442, 0.5
    %v448 = vtanh.pop %v446
    %v449 = vtanh.pop %v447
    %v450 = vadd.f32 %v448, 1.0
    %v451 = vadd.f32 %v449, 1.0
    %v452 = vmul.f32 %v450, 0.5
    %v453 = vmul.f32 %v451, 0.5
    %v454 = vtanh.pop %v440
    %v455 = vtanh.pop %v444
    %v456 = vmul.f32 %v452, %v454
    %v457 = vmul.f32 %v453, %v455
    %v458 = vmul.f32 %v439, 0.5
    %v459 = vmul.f32 %v443, 0.5
    %v460 = vtanh.pop %v458
    %v461 = vtanh.pop %v459
    %v462 = vadd.f32 %v460, 1.0
    %v463 = vadd.f32 %v461, 1.0
    %v464 = vmul.f32 %v462, 0.5
    %v465 = vmul.f32 %v463, 0.5
    %v466 = vmul.f32 %v464, %v350
    %v467 = vmul.f32 %v465, %v351
    %v468 = vadd.f32 %v456, %v466
    %v469 = vadd.f32 %v457, %v467
    %v470 = vmul.f32 %v441, 0.5
    %v471 = vmul.f32 %v445, 0.5
    %v472 = vtanh.pop %v470
    %v473 = vtanh.pop %v471
    %v474 = vadd.f32 %v472, 1.0
    %v475 = vadd.f32 %v473, 1.0
    %v476 = vmul.f32 %v474, 0.5
    %v477 = vmul.f32 %v475, 0.5
    %v478 = vtanh.pop %v468
    %v479 = vtanh.pop %v469
    %v480 = vmul.f32 %v476, %v478
    %v481 = vmul.f32 %v477, %v479
    %s482 = scalar_lea.vmem [#allocation9], 16
    %483 = vst [vmem:[%s482] sm:$0xff] %v480
    %484 = vst [vmem:[%s482 + $0x8] sm:$0xff] %v481
    %s485 = scalar_lea.vmem [#allocation10], 16
    %486 = vst [vmem:[%s485] sm:$0xff] %v468
    %487 = vst [vmem:[%s485 + $0x8] sm:$0xff] %v469
    %s488 = scalar_lea.vmem [#allocation4], 64
    %v489 = vld [vmem:[%s488] sm:$0xff]
    %v490 = vld [vmem:[%s488 + $0x8] sm:$0xff]
    %v491 = vld [vmem:[%s488 + $0x10] sm:$0xff]
    %v492 = vld [vmem:[%s488 + $0x18] sm:$0xff]
    %v493 = vunpack.c.l.bf16 %v489
    %v494 = vunpack.c.h.bf16 %v489
    %v495 = vunpack.c.l.bf16 %v490
    %v496 = vunpack.c.h.bf16 %v490
    %v497 = vunpack.c.l.bf16 %v491
    %v498 = vunpack.c.h.bf16 %v491
    %v499 = vunpack.c.l.bf16 %v492
    %v500 = vunpack.c.h.bf16 %v492
    %v501 = vpack.c.bf16 %v481, %v480
    %502 = vmatpush.bf16.msra.mxu0 %v228
    %503 = vmatpush.bf16.msra.mxu0 %v224
    %504 = vmatpush.bf16.msra.mxu0 %v220
    %505 = vmatpush.bf16.msra.mxu0 %v216
    %506 = vmatpush.bf16.msra.mxu0 %v212
    %507 = vmatpush.bf16.msra.mxu0 %v208
    %508 = vmatpush.bf16.msra.mxu0 %v204
    %509 = vmatpush.bf16.msra.mxu0 %v200
    %510 = vmatmul.bf16.gmra.mxu0 %v501
    %v511 = vpop.f32.mrf.mxu0
    %v512 = vadd.f32 0.0, %v511
    %v513 = vpop.f32.mrf.mxu0
    %v514 = vadd.f32 0.0, %v513
    %515 = vdwg.mxu0
    %516 = vmatpush.bf16.msra.mxu0 %v229
    %517 = vmatpush.bf16.msra.mxu0 %v225
    %518 = vmatpush.bf16.msra.mxu0 %v221
    %519 = vmatpush.bf16.msra.mxu0 %v217
    %520 = vmatpush.bf16.msra.mxu0 %v213
    %521 = vmatpush.bf16.msra.mxu0 %v209
    %522 = vmatpush.bf16.msra.mxu0 %v205
    %523 = vmatpush.bf16.msra.mxu0 %v201
    %524 = vmatmul.bf16.gmra.mxu0 %v501
    %v525 = vpop.f32.mrf.mxu0
    %v526 = vadd.f32 0.0, %v525
    %v527 = vpop.f32.mrf.mxu0
    %v528 = vadd.f32 0.0, %v527
    %529 = vdwg.mxu0
    %530 = vmatpush.bf16.msra.mxu0 %v230
    %531 = vmatpush.bf16.msra.mxu0 %v226
    %532 = vmatpush.bf16.msra.mxu0 %v222
    %533 = vmatpush.bf16.msra.mxu0 %v218
    %534 = vmatpush.bf16.msra.mxu0 %v214
    %535 = vmatpush.bf16.msra.mxu0 %v210
    %536 = vmatpush.bf16.msra.mxu0 %v206
    %537 = vmatpush.bf16.msra.mxu0 %v202
    %538 = vmatmul.bf16.gmra.mxu0 %v501
    %v539 = vpop.f32.mrf.mxu0
    %v540 = vadd.f32 0.0, %v539
    %v541 = vpop.f32.mrf.mxu0
    %v542 = vadd.f32 0.0, %v541
    %543 = vdwg.mxu0
    %544 = vmatpush.bf16.msra.mxu0 %v231
    %545 = vmatpush.bf16.msra.mxu0 %v227
    %546 = vmatpush.bf16.msra.mxu0 %v223
    %547 = vmatpush.bf16.msra.mxu0 %v219
    %548 = vmatpush.bf16.msra.mxu0 %v215
    %549 = vmatpush.bf16.msra.mxu0 %v211
    %550 = vmatpush.bf16.msra.mxu0 %v207
    %551 = vmatpush.bf16.msra.mxu0 %v203
    %552 = vmatmul.bf16.gmra.mxu0 %v501
    %v553 = vpop.f32.mrf.mxu0
    %v554 = vadd.f32 0.0, %v553
    %v555 = vpop.f32.mrf.mxu0
    %v556 = vadd.f32 0.0, %v555
    %557 = vdwg.mxu0
    %v558 = vadd.f32 %v493, %v512
    %v559 = vadd.f32 %v494, %v526
    %v560 = vadd.f32 %v495, %v540
    %v561 = vadd.f32 %v496, %v554
    %v562 = vadd.f32 %v497, %v514
    %v563 = vadd.f32 %v498, %v528
    %v564 = vadd.f32 %v499, %v542
    %v565 = vadd.f32 %v500, %v556
    %v566 = vmul.f32 %v558, 0.5
    %v567 = vmul.f32 %v562, 0.5
    %v568 = vtanh.pop %v566
    %v569 = vtanh.pop %v567
    %v570 = vadd.f32 %v568, 1.0
    %v571 = vadd.f32 %v569, 1.0
    %v572 = vmul.f32 %v570, 0.5
    %v573 = vmul.f32 %v571, 0.5
    %v574 = vtanh.pop %v560
    %v575 = vtanh.pop %v564
    %v576 = vmul.f32 %v572, %v574
    %v577 = vmul.f32 %v573, %v575
    %v578 = vmul.f32 %v559, 0.5
    %v579 = vmul.f32 %v563, 0.5
    %v580 = vtanh.pop %v578
    %v581 = vtanh.pop %v579
    %v582 = vadd.f32 %v580, 1.0
    %v583 = vadd.f32 %v581, 1.0
    %v584 = vmul.f32 %v582, 0.5
    %v585 = vmul.f32 %v583, 0.5
    %v586 = vmul.f32 %v584, %v468
    %v587 = vmul.f32 %v585, %v469
    %v588 = vadd.f32 %v576, %v586
    %v589 = vadd.f32 %v577, %v587
    %v590 = vmul.f32 %v561, 0.5
    %v591 = vmul.f32 %v565, 0.5
    %v592 = vtanh.pop %v590
    %v593 = vtanh.pop %v591
    %v594 = vadd.f32 %v592, 1.0
    %v595 = vadd.f32 %v593, 1.0
    %v596 = vmul.f32 %v594, 0.5
    %v597 = vmul.f32 %v595, 0.5
    %v598 = vtanh.pop %v588
    %v599 = vtanh.pop %v589
    %v600 = vmul.f32 %v596, %v598
    %v601 = vmul.f32 %v597, %v599
    %s602 = scalar_lea.vmem [#allocation9], 32
    %603 = vst [vmem:[%s602] sm:$0xff] %v600
    %604 = vst [vmem:[%s602 + $0x8] sm:$0xff] %v601
    %s605 = scalar_lea.vmem [#allocation10], 32
    %606 = vst [vmem:[%s605] sm:$0xff] %v588
    %607 = vst [vmem:[%s605 + $0x8] sm:$0xff] %v589
    %s608 = scalar_lea.vmem [#allocation4], 96
    %v609 = vld [vmem:[%s608] sm:$0xff]
    %v610 = vld [vmem:[%s608 + $0x8] sm:$0xff]
    %v611 = vld [vmem:[%s608 + $0x10] sm:$0xff]
    %v612 = vld [vmem:[%s608 + $0x18] sm:$0xff]
    %v613 = vunpack.c.l.bf16 %v609
    %v614 = vunpack.c.h.bf16 %v609
    %v615 = vunpack.c.l.bf16 %v610
    %v616 = vunpack.c.h.bf16 %v610
    %v617 = vunpack.c.l.bf16 %v611
    %v618 = vunpack.c.h.bf16 %v611
    %v619 = vunpack.c.l.bf16 %v612
    %v620 = vunpack.c.h.bf16 %v612
    %v621 = vpack.c.bf16 %v601, %v600
    %622 = vmatpush.bf16.msra.mxu0 %v228
    %623 = vmatpush.bf16.msra.mxu0 %v224
    %624 = vmatpush.bf16.msra.mxu0 %v220
    %625 = vmatpush.bf16.msra.mxu0 %v216
    %626 = vmatpush.bf16.msra.mxu0 %v212
    %627 = vmatpush.bf16.msra.mxu0 %v208
    %628 = vmatpush.bf16.msra.mxu0 %v204
    %629 = vmatpush.bf16.msra.mxu0 %v200
    %630 = vmatmul.bf16.gmra.mxu0 %v621
    %v631 = vpop.f32.mrf.mxu0
    %v632 = vadd.f32 0.0, %v631
    %v633 = vpop.f32.mrf.mxu0
    %v634 = vadd.f32 0.0, %v633
    %635 = vdwg.mxu0
    %636 = vmatpush.bf16.msra.mxu0 %v229
    %637 = vmatpush.bf16.msra.mxu0 %v225
    %638 = vmatpush.bf16.msra.mxu0 %v221
    %639 = vmatpush.bf16.msra.mxu0 %v217
    %640 = vmatpush.bf16.msra.mxu0 %v213
    %641 = vmatpush.bf16.msra.mxu0 %v209
    %642 = vmatpush.bf16.msra.mxu0 %v205
    %643 = vmatpush.bf16.msra.mxu0 %v201
    %644 = vmatmul.bf16.gmra.mxu0 %v621
    %v645 = vpop.f32.mrf.mxu0
    %v646 = vadd.f32 0.0, %v645
    %v647 = vpop.f32.mrf.mxu0
    %v648 = vadd.f32 0.0, %v647
    %649 = vdwg.mxu0
    %650 = vmatpush.bf16.msra.mxu0 %v230
    %651 = vmatpush.bf16.msra.mxu0 %v226
    %652 = vmatpush.bf16.msra.mxu0 %v222
    %653 = vmatpush.bf16.msra.mxu0 %v218
    %654 = vmatpush.bf16.msra.mxu0 %v214
    %655 = vmatpush.bf16.msra.mxu0 %v210
    %656 = vmatpush.bf16.msra.mxu0 %v206
    %657 = vmatpush.bf16.msra.mxu0 %v202
    %658 = vmatmul.bf16.gmra.mxu0 %v621
    %v659 = vpop.f32.mrf.mxu0
    %v660 = vadd.f32 0.0, %v659
    %v661 = vpop.f32.mrf.mxu0
    %v662 = vadd.f32 0.0, %v661
    %663 = vdwg.mxu0
    %664 = vmatpush.bf16.msra.mxu0 %v231
    %665 = vmatpush.bf16.msra.mxu0 %v227
    %666 = vmatpush.bf16.msra.mxu0 %v223
    %667 = vmatpush.bf16.msra.mxu0 %v219
    %668 = vmatpush.bf16.msra.mxu0 %v215
    %669 = vmatpush.bf16.msra.mxu0 %v211
    %670 = vmatpush.bf16.msra.mxu0 %v207
    %671 = vmatpush.bf16.msra.mxu0 %v203
    %672 = vmatmul.bf16.gmra.mxu0 %v621
    %v673 = vpop.f32.mrf.mxu0
    %v674 = vadd.f32 0.0, %v673
    %v675 = vpop.f32.mrf.mxu0
    %v676 = vadd.f32 0.0, %v675
    %677 = vdwg.mxu0
    %v678 = vadd.f32 %v613, %v632
    %v679 = vadd.f32 %v614, %v646
    %v680 = vadd.f32 %v615, %v660
    %v681 = vadd.f32 %v616, %v674
    %v682 = vadd.f32 %v617, %v634
    %v683 = vadd.f32 %v618, %v648
    %v684 = vadd.f32 %v619, %v662
    %v685 = vadd.f32 %v620, %v676
    %v686 = vmul.f32 %v678, 0.5
    %v687 = vmul.f32 %v682, 0.5
    %v688 = vtanh.pop %v686
    %v689 = vtanh.pop %v687
    %v690 = vadd.f32 %v688, 1.0
    %v691 = vadd.f32 %v689, 1.0
    %v692 = vmul.f32 %v690, 0.5
    %v693 = vmul.f32 %v691, 0.5
    %v694 = vtanh.pop %v680
    %v695 = vtanh.pop %v684
    %v696 = vmul.f32 %v692, %v694
    %v697 = vmul.f32 %v693, %v695
    %v698 = vmul.f32 %v679, 0.5
    %v699 = vmul.f32 %v683, 0.5
    %v700 = vtanh.pop %v698
    %v701 = vtanh.pop %v699
    %v702 = vadd.f32 %v700, 1.0
    %v703 = vadd.f32 %v701, 1.0
    %v704 = vmul.f32 %v702, 0.5
    %v705 = vmul.f32 %v703, 0.5
    %v706 = vmul.f32 %v704, %v588
    %v707 = vmul.f32 %v705, %v589
    %v708 = vadd.f32 %v696, %v706
    %v709 = vadd.f32 %v697, %v707
    %v710 = vmul.f32 %v681, 0.5
    %v711 = vmul.f32 %v685, 0.5
    %v712 = vtanh.pop %v710
    %v713 = vtanh.pop %v711
    %v714 = vadd.f32 %v712, 1.0
    %v715 = vadd.f32 %v713, 1.0
    %v716 = vmul.f32 %v714, 0.5
    %v717 = vmul.f32 %v715, 0.5
    %v718 = vtanh.pop %v708
    %v719 = vtanh.pop %v709
    %v720 = vmul.f32 %v716, %v718
    %v721 = vmul.f32 %v717, %v719
    %s722 = scalar_lea.vmem [#allocation9], 48
    %723 = vst [vmem:[%s722] sm:$0xff] %v720
    %724 = vst [vmem:[%s722 + $0x8] sm:$0xff] %v721
    %s725 = scalar_lea.vmem [#allocation10], 48
    %726 = vst [vmem:[%s725] sm:$0xff] %v708
    %727 = vst [vmem:[%s725 + $0x8] sm:$0xff] %v709
    %s728 = scalar_lea.vmem [#allocation4], 128
    %v729 = vld [vmem:[%s728] sm:$0xff]
    %v730 = vld [vmem:[%s728 + $0x8] sm:$0xff]
    %v731 = vld [vmem:[%s728 + $0x10] sm:$0xff]
    %v732 = vld [vmem:[%s728 + $0x18] sm:$0xff]
    %v733 = vunpack.c.l.bf16 %v729
    %v734 = vunpack.c.h.bf16 %v729
    %v735 = vunpack.c.l.bf16 %v730
    %v736 = vunpack.c.h.bf16 %v730
    %v737 = vunpack.c.l.bf16 %v731
    %v738 = vunpack.c.h.bf16 %v731
    %v739 = vunpack.c.l.bf16 %v732
    %v740 = vunpack.c.h.bf16 %v732
    %v741 = vpack.c.bf16 %v721, %v720
    %742 = vmatpush.bf16.msra.mxu0 %v228
    %743 = vmatpush.bf16.msra.mxu0 %v224
    %744 = vmatpush.bf16.msra.mxu0 %v220
    %745 = vmatpush.bf16.msra.mxu0 %v216
    %746 = vmatpush.bf16.msra.mxu0 %v212
    %747 = vmatpush.bf16.msra.mxu0 %v208
    %748 = vmatpush.bf16.msra.mxu0 %v204
    %749 = vmatpush.bf16.msra.mxu0 %v200
    %750 = vmatmul.bf16.gmra.mxu0 %v741
    %v751 = vpop.f32.mrf.mxu0
    %v752 = vadd.f32 0.0, %v751
    %v753 = vpop.f32.mrf.mxu0
    %v754 = vadd.f32 0.0, %v753
    %755 = vdwg.mxu0
    %756 = vmatpush.bf16.msra.mxu0 %v229
    %757 = vmatpush.bf16.msra.mxu0 %v225
    %758 = vmatpush.bf16.msra.mxu0 %v221
    %759 = vmatpush.bf16.msra.mxu0 %v217
    %760 = vmatpush.bf16.msra.mxu0 %v213
    %761 = vmatpush.bf16.msra.mxu0 %v209
    %762 = vmatpush.bf16.msra.mxu0 %v205
    %763 = vmatpush.bf16.msra.mxu0 %v201
    %764 = vmatmul.bf16.gmra.mxu0 %v741
    %v765 = vpop.f32.mrf.mxu0
    %v766 = vadd.f32 0.0, %v765
    %v767 = vpop.f32.mrf.mxu0
    %v768 = vadd.f32 0.0, %v767
    %769 = vdwg.mxu0
    %770 = vmatpush.bf16.msra.mxu0 %v230
    %771 = vmatpush.bf16.msra.mxu0 %v226
    %772 = vmatpush.bf16.msra.mxu0 %v222
    %773 = vmatpush.bf16.msra.mxu0 %v218
    %774 = vmatpush.bf16.msra.mxu0 %v214
    %775 = vmatpush.bf16.msra.mxu0 %v210
    %776 = vmatpush.bf16.msra.mxu0 %v206
    %777 = vmatpush.bf16.msra.mxu0 %v202
    %778 = vmatmul.bf16.gmra.mxu0 %v741
    %v779 = vpop.f32.mrf.mxu0
    %v780 = vadd.f32 0.0, %v779
    %v781 = vpop.f32.mrf.mxu0
    %v782 = vadd.f32 0.0, %v781
    %783 = vdwg.mxu0
    %784 = vmatpush.bf16.msra.mxu0 %v231
    %785 = vmatpush.bf16.msra.mxu0 %v227
    %786 = vmatpush.bf16.msra.mxu0 %v223
    %787 = vmatpush.bf16.msra.mxu0 %v219
    %788 = vmatpush.bf16.msra.mxu0 %v215
    %789 = vmatpush.bf16.msra.mxu0 %v211
    %790 = vmatpush.bf16.msra.mxu0 %v207
    %791 = vmatpush.bf16.msra.mxu0 %v203
    %792 = vmatmul.bf16.gmra.mxu0 %v741
    %v793 = vpop.f32.mrf.mxu0
    %v794 = vadd.f32 0.0, %v793
    %v795 = vpop.f32.mrf.mxu0
    %v796 = vadd.f32 0.0, %v795
    %797 = vdwg.mxu0
    %v798 = vadd.f32 %v733, %v752
    %v799 = vadd.f32 %v734, %v766
    %v800 = vadd.f32 %v735, %v780
    %v801 = vadd.f32 %v736, %v794
    %v802 = vadd.f32 %v737, %v754
    %v803 = vadd.f32 %v738, %v768
    %v804 = vadd.f32 %v739, %v782
    %v805 = vadd.f32 %v740, %v796
    %v806 = vmul.f32 %v798, 0.5
    %v807 = vmul.f32 %v802, 0.5
    %v808 = vtanh.pop %v806
    %v809 = vtanh.pop %v807
    %v810 = vadd.f32 %v808, 1.0
    %v811 = vadd.f32 %v809, 1.0
    %v812 = vmul.f32 %v810, 0.5
    %v813 = vmul.f32 %v811, 0.5
    %v814 = vtanh.pop %v800
    %v815 = vtanh.pop %v804
    %v816 = vmul.f32 %v812, %v814
    %v817 = vmul.f32 %v813, %v815
    %v818 = vmul.f32 %v799, 0.5
    %v819 = vmul.f32 %v803, 0.5
    %v820 = vtanh.pop %v818
    %v821 = vtanh.pop %v819
    %v822 = vadd.f32 %v820, 1.0
    %v823 = vadd.f32 %v821, 1.0
    %v824 = vmul.f32 %v822, 0.5
    %v825 = vmul.f32 %v823, 0.5
    %v826 = vmul.f32 %v824, %v708
    %v827 = vmul.f32 %v825, %v709
    %v828 = vadd.f32 %v816, %v826
    %v829 = vadd.f32 %v817, %v827
    %v830 = vmul.f32 %v801, 0.5
    %v831 = vmul.f32 %v805, 0.5
    %v832 = vtanh.pop %v830
    %v833 = vtanh.pop %v831
    %v834 = vadd.f32 %v832, 1.0
    %v835 = vadd.f32 %v833, 1.0
    %v836 = vmul.f32 %v834, 0.5
    %v837 = vmul.f32 %v835, 0.5
    %v838 = vtanh.pop %v828
    %v839 = vtanh.pop %v829
    %v840 = vmul.f32 %v836, %v838
    %v841 = vmul.f32 %v837, %v839
    %s842 = scalar_lea.vmem [#allocation9], 64
    %843 = vst [vmem:[%s842] sm:$0xff] %v840
    %844 = vst [vmem:[%s842 + $0x8] sm:$0xff] %v841
    %s845 = scalar_lea.vmem [#allocation10], 64
    %846 = vst [vmem:[%s845] sm:$0xff] %v828
    %847 = vst [vmem:[%s845 + $0x8] sm:$0xff] %v829
    %s848 = scalar_lea.vmem [#allocation4], 160
    %v849 = vld [vmem:[%s848] sm:$0xff]
    %v850 = vld [vmem:[%s848 + $0x8] sm:$0xff]
    %v851 = vld [vmem:[%s848 + $0x10] sm:$0xff]
    %v852 = vld [vmem:[%s848 + $0x18] sm:$0xff]
    %v853 = vunpack.c.l.bf16 %v849
    %v854 = vunpack.c.h.bf16 %v849
    %v855 = vunpack.c.l.bf16 %v850
    %v856 = vunpack.c.h.bf16 %v850
    %v857 = vunpack.c.l.bf16 %v851
    %v858 = vunpack.c.h.bf16 %v851
    %v859 = vunpack.c.l.bf16 %v852
    %v860 = vunpack.c.h.bf16 %v852
    %v861 = vpack.c.bf16 %v841, %v840
    %862 = vmatpush.bf16.msra.mxu0 %v228
    %863 = vmatpush.bf16.msra.mxu0 %v224
    %864 = vmatpush.bf16.msra.mxu0 %v220
    %865 = vmatpush.bf16.msra.mxu0 %v216
    %866 = vmatpush.bf16.msra.mxu0 %v212
    %867 = vmatpush.bf16.msra.mxu0 %v208
    %868 = vmatpush.bf16.msra.mxu0 %v204
    %869 = vmatpush.bf16.msra.mxu0 %v200
    %870 = vmatmul.bf16.gmra.mxu0 %v861
    %v871 = vpop.f32.mrf.mxu0
    %v872 = vadd.f32 0.0, %v871
    %v873 = vpop.f32.mrf.mxu0
    %v874 = vadd.f32 0.0, %v873
    %875 = vdwg.mxu0
    %876 = vmatpush.bf16.msra.mxu0 %v229
    %877 = vmatpush.bf16.msra.mxu0 %v225
    %878 = vmatpush.bf16.msra.mxu0 %v221
    %879 = vmatpush.bf16.msra.mxu0 %v217
    %880 = vmatpush.bf16.msra.mxu0 %v213
    %881 = vmatpush.bf16.msra.mxu0 %v209
    %882 = vmatpush.bf16.msra.mxu0 %v205
    %883 = vmatpush.bf16.msra.mxu0 %v201
    %884 = vmatmul.bf16.gmra.mxu0 %v861
    %v885 = vpop.f32.mrf.mxu0
    %v886 = vadd.f32 0.0, %v885
    %v887 = vpop.f32.mrf.mxu0
    %v888 = vadd.f32 0.0, %v887
    %889 = vdwg.mxu0
    %890 = vmatpush.bf16.msra.mxu0 %v230
    %891 = vmatpush.bf16.msra.mxu0 %v226
    %892 = vmatpush.bf16.msra.mxu0 %v222
    %893 = vmatpush.bf16.msra.mxu0 %v218
    %894 = vmatpush.bf16.msra.mxu0 %v214
    %895 = vmatpush.bf16.msra.mxu0 %v210
    %896 = vmatpush.bf16.msra.mxu0 %v206
    %897 = vmatpush.bf16.msra.mxu0 %v202
    %898 = vmatmul.bf16.gmra.mxu0 %v861
    %v899 = vpop.f32.mrf.mxu0
    %v900 = vadd.f32 0.0, %v899
    %v901 = vpop.f32.mrf.mxu0
    %v902 = vadd.f32 0.0, %v901
    %903 = vdwg.mxu0
    %904 = vmatpush.bf16.msra.mxu0 %v231
    %905 = vmatpush.bf16.msra.mxu0 %v227
    %906 = vmatpush.bf16.msra.mxu0 %v223
    %907 = vmatpush.bf16.msra.mxu0 %v219
    %908 = vmatpush.bf16.msra.mxu0 %v215
    %909 = vmatpush.bf16.msra.mxu0 %v211
    %910 = vmatpush.bf16.msra.mxu0 %v207
    %911 = vmatpush.bf16.msra.mxu0 %v203
    %912 = vmatmul.bf16.gmra.mxu0 %v861
    %v913 = vpop.f32.mrf.mxu0
    %v914 = vadd.f32 0.0, %v913
    %v915 = vpop.f32.mrf.mxu0
    %v916 = vadd.f32 0.0, %v915
    %917 = vdwg.mxu0
    %v918 = vadd.f32 %v853, %v872
    %v919 = vadd.f32 %v854, %v886
    %v920 = vadd.f32 %v855, %v900
    %v921 = vadd.f32 %v856, %v914
    %v922 = vadd.f32 %v857, %v874
    %v923 = vadd.f32 %v858, %v888
    %v924 = vadd.f32 %v859, %v902
    %v925 = vadd.f32 %v860, %v916
    %v926 = vmul.f32 %v918, 0.5
    %v927 = vmul.f32 %v922, 0.5
    %v928 = vtanh.pop %v926
    %v929 = vtanh.pop %v927
    %v930 = vadd.f32 %v928, 1.0
    %v931 = vadd.f32 %v929, 1.0
    %v932 = vmul.f32 %v930, 0.5
    %v933 = vmul.f32 %v931, 0.5
    %v934 = vtanh.pop %v920
    %v935 = vtanh.pop %v924
    %v936 = vmul.f32 %v932, %v934
    %v937 = vmul.f32 %v933, %v935
    %v938 = vmul.f32 %v919, 0.5
    %v939 = vmul.f32 %v923, 0.5
    %v940 = vtanh.pop %v938
    %v941 = vtanh.pop %v939
    %v942 = vadd.f32 %v940, 1.0
    %v943 = vadd.f32 %v941, 1.0
    %v944 = vmul.f32 %v942, 0.5
    %v945 = vmul.f32 %v943, 0.5
    %v946 = vmul.f32 %v944, %v828
    %v947 = vmul.f32 %v945, %v829
    %v948 = vadd.f32 %v936, %v946
    %v949 = vadd.f32 %v937, %v947
    %v950 = vmul.f32 %v921, 0.5
    %v951 = vmul.f32 %v925, 0.5
    %v952 = vtanh.pop %v950
    %v953 = vtanh.pop %v951
    %v954 = vadd.f32 %v952, 1.0
    %v955 = vadd.f32 %v953, 1.0
    %v956 = vmul.f32 %v954, 0.5
    %v957 = vmul.f32 %v955, 0.5
    %v958 = vtanh.pop %v948
    %v959 = vtanh.pop %v949
    %v960 = vmul.f32 %v956, %v958
    %v961 = vmul.f32 %v957, %v959
    %s962 = scalar_lea.vmem [#allocation9], 80
    %963 = vst [vmem:[%s962] sm:$0xff] %v960
    %964 = vst [vmem:[%s962 + $0x8] sm:$0xff] %v961
    %s965 = scalar_lea.vmem [#allocation10], 80
    %966 = vst [vmem:[%s965] sm:$0xff] %v948
    %967 = vst [vmem:[%s965 + $0x8] sm:$0xff] %v949
    %s968 = scalar_lea.vmem [#allocation4], 192
    %v969 = vld [vmem:[%s968] sm:$0xff]
    %v970 = vld [vmem:[%s968 + $0x8] sm:$0xff]
    %v971 = vld [vmem:[%s968 + $0x10] sm:$0xff]
    %v972 = vld [vmem:[%s968 + $0x18] sm:$0xff]
    %v973 = vunpack.c.l.bf16 %v969
    %v974 = vunpack.c.h.bf16 %v969
    %v975 = vunpack.c.l.bf16 %v970
    %v976 = vunpack.c.h.bf16 %v970
    %v977 = vunpack.c.l.bf16 %v971
    %v978 = vunpack.c.h.bf16 %v971
    %v979 = vunpack.c.l.bf16 %v972
    %v980 = vunpack.c.h.bf16 %v972
    %v981 = vpack.c.bf16 %v961, %v960
    %982 = vmatpush.bf16.msra.mxu0 %v228
    %983 = vmatpush.bf16.msra.mxu0 %v224
    %984 = vmatpush.bf16.msra.mxu0 %v220
    %985 = vmatpush.bf16.msra.mxu0 %v216
    %986 = vmatpush.bf16.msra.mxu0 %v212
    %987 = vmatpush.bf16.msra.mxu0 %v208
    %988 = vmatpush.bf16.msra.mxu0 %v204
    %989 = vmatpush.bf16.msra.mxu0 %v200
    %990 = vmatmul.bf16.gmra.mxu0 %v981
    %v991 = vpop.f32.mrf.mxu0
    %v992 = vadd.f32 0.0, %v991
    %v993 = vpop.f32.mrf.mxu0
    %v994 = vadd.f32 0.0, %v993
    %995 = vdwg.mxu0
    %996 = vmatpush.bf16.msra.mxu0 %v229
    %997 = vmatpush.bf16.msra.mxu0 %v225
    %998 = vmatpush.bf16.msra.mxu0 %v221
    %999 = vmatpush.bf16.msra.mxu0 %v217
    %1000 = vmatpush.bf16.msra.mxu0 %v213
    %1001 = vmatpush.bf16.msra.mxu0 %v209
    %1002 = vmatpush.bf16.msra.mxu0 %v205
    %1003 = vmatpush.bf16.msra.mxu0 %v201
    %1004 = vmatmul.bf16.gmra.mxu0 %v981
    %v1005 = vpop.f32.mrf.mxu0
    %v1006 = vadd.f32 0.0, %v1005
    %v1007 = vpop.f32.mrf.mxu0
    %v1008 = vadd.f32 0.0, %v1007
    %1009 = vdwg.mxu0
    %1010 = vmatpush.bf16.msra.mxu0 %v230
    %1011 = vmatpush.bf16.msra.mxu0 %v226
    %1012 = vmatpush.bf16.msra.mxu0 %v222
    %1013 = vmatpush.bf16.msra.mxu0 %v218
    %1014 = vmatpush.bf16.msra.mxu0 %v214
    %1015 = vmatpush.bf16.msra.mxu0 %v210
    %1016 = vmatpush.bf16.msra.mxu0 %v206
    %1017 = vmatpush.bf16.msra.mxu0 %v202
    %1018 = vmatmul.bf16.gmra.mxu0 %v981
    %v1019 = vpop.f32.mrf.mxu0
    %v1020 = vadd.f32 0.0, %v1019
    %v1021 = vpop.f32.mrf.mxu0
    %v1022 = vadd.f32 0.0, %v1021
    %1023 = vdwg.mxu0
    %1024 = vmatpush.bf16.msra.mxu0 %v231
    %1025 = vmatpush.bf16.msra.mxu0 %v227
    %1026 = vmatpush.bf16.msra.mxu0 %v223
    %1027 = vmatpush.bf16.msra.mxu0 %v219
    %1028 = vmatpush.bf16.msra.mxu0 %v215
    %1029 = vmatpush.bf16.msra.mxu0 %v211
    %1030 = vmatpush.bf16.msra.mxu0 %v207
    %1031 = vmatpush.bf16.msra.mxu0 %v203
    %1032 = vmatmul.bf16.gmra.mxu0 %v981
    %v1033 = vpop.f32.mrf.mxu0
    %v1034 = vadd.f32 0.0, %v1033
    %v1035 = vpop.f32.mrf.mxu0
    %v1036 = vadd.f32 0.0, %v1035
    %1037 = vdwg.mxu0
    %v1038 = vadd.f32 %v973, %v992
    %v1039 = vadd.f32 %v974, %v1006
    %v1040 = vadd.f32 %v975, %v1020
    %v1041 = vadd.f32 %v976, %v1034
    %v1042 = vadd.f32 %v977, %v994
    %v1043 = vadd.f32 %v978, %v1008
    %v1044 = vadd.f32 %v979, %v1022
    %v1045 = vadd.f32 %v980, %v1036
    %v1046 = vmul.f32 %v1038, 0.5
    %v1047 = vmul.f32 %v1042, 0.5
    %v1048 = vtanh.pop %v1046
    %v1049 = vtanh.pop %v1047
    %v1050 = vadd.f32 %v1048, 1.0
    %v1051 = vadd.f32 %v1049, 1.0
    %v1052 = vmul.f32 %v1050, 0.5
    %v1053 = vmul.f32 %v1051, 0.5
    %v1054 = vtanh.pop %v1040
    %v1055 = vtanh.pop %v1044
    %v1056 = vmul.f32 %v1052, %v1054
    %v1057 = vmul.f32 %v1053, %v1055
    %v1058 = vmul.f32 %v1039, 0.5
    %v1059 = vmul.f32 %v1043, 0.5
    %v1060 = vtanh.pop %v1058
    %v1061 = vtanh.pop %v1059
    %v1062 = vadd.f32 %v1060, 1.0
    %v1063 = vadd.f32 %v1061, 1.0
    %v1064 = vmul.f32 %v1062, 0.5
    %v1065 = vmul.f32 %v1063, 0.5
    %v1066 = vmul.f32 %v1064, %v948
    %v1067 = vmul.f32 %v1065, %v949
    %v1068 = vadd.f32 %v1056, %v1066
    %v1069 = vadd.f32 %v1057, %v1067
    %v1070 = vmul.f32 %v1041, 0.5
    %v1071 = vmul.f32 %v1045, 0.5
    %v1072 = vtanh.pop %v1070
    %v1073 = vtanh.pop %v1071
    %v1074 = vadd.f32 %v1072, 1.0
    %v1075 = vadd.f32 %v1073, 1.0
    %v1076 = vmul.f32 %v1074, 0.5
    %v1077 = vmul.f32 %v1075, 0.5
    %v1078 = vtanh.pop %v1068
    %v1079 = vtanh.pop %v1069
    %v1080 = vmul.f32 %v1076, %v1078
    %v1081 = vmul.f32 %v1077, %v1079
    %s1082 = scalar_lea.vmem [#allocation9], 96
    %1083 = vst [vmem:[%s1082] sm:$0xff] %v1080
    %1084 = vst [vmem:[%s1082 + $0x8] sm:$0xff] %v1081
    %s1085 = scalar_lea.vmem [#allocation10], 96
    %1086 = vst [vmem:[%s1085] sm:$0xff] %v1068
    %1087 = vst [vmem:[%s1085 + $0x8] sm:$0xff] %v1069
    %s1088 = scalar_lea.vmem [#allocation4], 224
    %v1089 = vld [vmem:[%s1088] sm:$0xff]
    %v1090 = vld [vmem:[%s1088 + $0x8] sm:$0xff]
    %v1091 = vld [vmem:[%s1088 + $0x10] sm:$0xff]
    %v1092 = vld [vmem:[%s1088 + $0x18] sm:$0xff]
    %v1093 = vunpack.c.l.bf16 %v1089
    %v1094 = vunpack.c.h.bf16 %v1089
    %v1095 = vunpack.c.l.bf16 %v1090
    %v1096 = vunpack.c.h.bf16 %v1090
    %v1097 = vunpack.c.l.bf16 %v1091
    %v1098 = vunpack.c.h.bf16 %v1091
    %v1099 = vunpack.c.l.bf16 %v1092
    %v1100 = vunpack.c.h.bf16 %v1092
    %v1101 = vpack.c.bf16 %v1081, %v1080
    %1102 = vmatpush.bf16.msra.mxu0 %v228
    %1103 = vmatpush.bf16.msra.mxu0 %v224
    %1104 = vmatpush.bf16.msra.mxu0 %v220
    %1105 = vmatpush.bf16.msra.mxu0 %v216
    %1106 = vmatpush.bf16.msra.mxu0 %v212
    %1107 = vmatpush.bf16.msra.mxu0 %v208
    %1108 = vmatpush.bf16.msra.mxu0 %v204
    %1109 = vmatpush.bf16.msra.mxu0 %v200
    %1110 = vmatmul.bf16.gmra.mxu0 %v1101
    %v1111 = vpop.f32.mrf.mxu0
    %v1112 = vadd.f32 0.0, %v1111
    %v1113 = vpop.f32.mrf.mxu0
    %v1114 = vadd.f32 0.0, %v1113
    %1115 = vdwg.mxu0
    %1116 = vmatpush.bf16.msra.mxu0 %v229
    %1117 = vmatpush.bf16.msra.mxu0 %v225
    %1118 = vmatpush.bf16.msra.mxu0 %v221
    %1119 = vmatpush.bf16.msra.mxu0 %v217
    %1120 = vmatpush.bf16.msra.mxu0 %v213
    %1121 = vmatpush.bf16.msra.mxu0 %v209
    %1122 = vmatpush.bf16.msra.mxu0 %v205
    %1123 = vmatpush.bf16.msra.mxu0 %v201
    %1124 = vmatmul.bf16.gmra.mxu0 %v1101
    %v1125 = vpop.f32.mrf.mxu0
    %v1126 = vadd.f32 0.0, %v1125
    %v1127 = vpop.f32.mrf.mxu0
    %v1128 = vadd.f32 0.0, %v1127
    %1129 = vdwg.mxu0
    %1130 = vmatpush.bf16.msra.mxu0 %v230
    %1131 = vmatpush.bf16.msra.mxu0 %v226
    %1132 = vmatpush.bf16.msra.mxu0 %v222
    %1133 = vmatpush.bf16.msra.mxu0 %v218
    %1134 = vmatpush.bf16.msra.mxu0 %v214
    %1135 = vmatpush.bf16.msra.mxu0 %v210
    %1136 = vmatpush.bf16.msra.mxu0 %v206
    %1137 = vmatpush.bf16.msra.mxu0 %v202
    %1138 = vmatmul.bf16.gmra.mxu0 %v1101
    %v1139 = vpop.f32.mrf.mxu0
    %v1140 = vadd.f32 0.0, %v1139
    %v1141 = vpop.f32.mrf.mxu0
    %v1142 = vadd.f32 0.0, %v1141
    %1143 = vdwg.mxu0
    %1144 = vmatpush.bf16.msra.mxu0 %v231
    %1145 = vmatpush.bf16.msra.mxu0 %v227
    %1146 = vmatpush.bf16.msra.mxu0 %v223
    %1147 = vmatpush.bf16.msra.mxu0 %v219
    %1148 = vmatpush.bf16.msra.mxu0 %v215
    %1149 = vmatpush.bf16.msra.mxu0 %v211
    %1150 = vmatpush.bf16.msra.mxu0 %v207
    %1151 = vmatpush.bf16.msra.mxu0 %v203
    %1152 = vmatmul.bf16.gmra.mxu0 %v1101
    %v1153 = vpop.f32.mrf.mxu0
    %v1154 = vadd.f32 0.0, %v1153
    %v1155 = vpop.f32.mrf.mxu0
    %v1156 = vadd.f32 0.0, %v1155
    %1157 = vdwg.mxu0
    %v1158 = vadd.f32 %v1093, %v1112
    %v1159 = vadd.f32 %v1094, %v1126
    %v1160 = vadd.f32 %v1095, %v1140
    %v1161 = vadd.f32 %v1096, %v1154
    %v1162 = vadd.f32 %v1097, %v1114
    %v1163 = vadd.f32 %v1098, %v1128
    %v1164 = vadd.f32 %v1099, %v1142
    %v1165 = vadd.f32 %v1100, %v1156
    %v1166 = vmul.f32 %v1158, 0.5
    %v1167 = vmul.f32 %v1162, 0.5
    %v1168 = vtanh.pop %v1166
    %v1169 = vtanh.pop %v1167
    %v1170 = vadd.f32 %v1168, 1.0
    %v1171 = vadd.f32 %v1169, 1.0
    %v1172 = vmul.f32 %v1170, 0.5
    %v1173 = vmul.f32 %v1171, 0.5
    %v1174 = vtanh.pop %v1160
    %v1175 = vtanh.pop %v1164
    %v1176 = vmul.f32 %v1172, %v1174
    %v1177 = vmul.f32 %v1173, %v1175
    %v1178 = vmul.f32 %v1159, 0.5
    %v1179 = vmul.f32 %v1163, 0.5
    %v1180 = vtanh.pop %v1178
    %v1181 = vtanh.pop %v1179
    %v1182 = vadd.f32 %v1180, 1.0
    %v1183 = vadd.f32 %v1181, 1.0
    %v1184 = vmul.f32 %v1182, 0.5
    %v1185 = vmul.f32 %v1183, 0.5
    %v1186 = vmul.f32 %v1184, %v1068
    %v1187 = vmul.f32 %v1185, %v1069
    %v1188 = vadd.f32 %v1176, %v1186
    %v1189 = vadd.f32 %v1177, %v1187
    %v1190 = vmul.f32 %v1161, 0.5
    %v1191 = vmul.f32 %v1165, 0.5
    %v1192 = vtanh.pop %v1190
    %v1193 = vtanh.pop %v1191
    %v1194 = vadd.f32 %v1192, 1.0
    %v1195 = vadd.f32 %v1193, 1.0
    %v1196 = vmul.f32 %v1194, 0.5
    %v1197 = vmul.f32 %v1195, 0.5
    %v1198 = vtanh.pop %v1188
    %v1199 = vtanh.pop %v1189
    %v1200 = vmul.f32 %v1196, %v1198
    %v1201 = vmul.f32 %v1197, %v1199
    %s1202 = scalar_lea.vmem [#allocation9], 112
    %1203 = vst [vmem:[%s1202] sm:$0xff] %v1200
    %1204 = vst [vmem:[%s1202 + $0x8] sm:$0xff] %v1201
    %s1205 = scalar_lea.vmem [#allocation10], 112
    %1206 = vst [vmem:[%s1205] sm:$0xff] %v1188
    %1207 = vst [vmem:[%s1205 + $0x8] sm:$0xff] %v1189
    %1208 = vst [vmem:[#allocation2] sm:$0xff] %v1200
    %1209 = vst [vmem:[#allocation2 + $0x8] sm:$0xff] %v1201
    %1210 = vst [vmem:[#allocation3] sm:$0xff] %v1188
    %1211 = vst [vmem:[#allocation3 + $0x8] sm:$0xff] %v1189
    // Predicated region
    $region22: #{tpu_custom_call.1} parent=1 // pred_check
      _
    $region23: #{tpu_custom_call.1} parent=1 // pred_check_branch
      %1213 = sbr.rel (0) target = $region25
    $region24: #{tpu_custom_call.1} parent=1 // pred_region
      %1215 = vsyncadd [#allocation6], 0
      %s1216 = sshll.u32 [#allocation9], 4
      %s1217 = int_to_ptr.vmem [resolvable:$true] %s1216
      %s1218 = sshll.u32 %s2, 4
      %s1219 = int_to_ptr.hbm [resolvable:$true] %s1218
      %1224 = dma.vmem_to_hbm [thread:$0]  %s1217, 2048, %s1219, [#allocation6], 128, 128, 8
    $region25: #{tpu_custom_call.1} parent=1 // pred_fallthru
      _
    // Predicated region
    $region26: #{tpu_custom_call.1} parent=1 // pred_check
      _
    $region27: #{tpu_custom_call.1} parent=1 // pred_check_branch
      %1226 = sbr.rel (0) target = $region29
    $region28: #{tpu_custom_call.1} parent=1 // pred_region
      %1228 = vsyncadd [#allocation11], 0
      %s1229 = sshll.u32 [#allocation10], 4
      %s1230 = int_to_ptr.vmem [resolvable:$true] %s1229
      %s1231 = sshll.u32 %s3, 4
      %s1232 = int_to_ptr.hbm [resolvable:$true] %s1231
      %1237 = dma.vmem_to_hbm [thread:$0]  %s1230, 2048, %s1232, [#allocation11], 128, 128, 8
    $region29: #{tpu_custom_call.1} parent=1 // pred_fallthru
      _
    // Predicated region
    $region30: #{tpu_custom_call.1} parent=1 // pred_check
      _
    $region31: #{tpu_custom_call.1} parent=1 // pred_check_branch
      %1239 = sbr.rel (0) target = $region33
    $region32: #{tpu_custom_call.1} parent=1 // pred_region
      %1241 = dma.done [#allocation6], 2048
    $region33: #{tpu_custom_call.1} parent=1 // pred_fallthru
      _
    // Predicated region
    $region34: #{tpu_custom_call.1} parent=1 // pred_check
      _
    $region35: #{tpu_custom_call.1} parent=1 // pred_check_branch
      %1243 = sbr.rel (0) target = $region37
    $region36: #{tpu_custom_call.1} parent=1 // pred_region
      %1245 = dma.done [#allocation11], 2048
    $region37: #{tpu_custom_call.1} parent=1 // pred_fallthru
      _
    %1246 = vsyncpa [#allocation5], 1
    %1247 = vsyncpa [#allocation8], 1
    %1248 = vsyncpa [#allocation6], 1
    %1249 = vsyncpa [#allocation11], 1

</llo_original>
